<compile_context>
chip_gen: v5e
topology: v5e:2x2
jax: 0.10.0
libtpu: 0.0.40
codegen_flags: <defaults>
</compile_context>

<pallas_src>
import jax
import jax.numpy as jnp
from jax.experimental import pallas as pl
from jax.experimental.pallas import tpu as pltpu


def _elu(x):
    # ELU (alpha=1.0, matches F.elu default), f32. Clamp before exp so the
    # discarded positive branch never produces inf.
    return jnp.where(x > 0, x, jnp.exp(jnp.minimum(x, 0.0)) - 1.0)


def _round_up(a, b):
    return (a + b - 1) // b * b


def grn_kernel(x_ref, w1s_ref, b1s_ref, w2_ref, b2_ref, wg_ref, bg_ref,
               gamma_ref, beta_ref, o_ref):
    H = o_ref.shape[-1]
    mxu_dtype = w1s_ref.dtype

    # Cast x on the VPU, under the input DMA (wrapper passes f32 straight
    # through -> the kernel is the only pass over x in HBM).
    x = x_ref[...].astype(mxu_dtype)                                  # (tm, F)

    # Fused first layer + skip projection: one x @ [W1 | Ws] MXU pass.
    h1s = jnp.dot(x, w1s_ref[...],
                  preferred_element_type=jnp.float32) + b1s_ref[...]  # (tm, 2H)
    h1 = _elu(h1s[:, :H])                                             # linear1 + ELU
    res = h1s[:, H:]                                                  # skip projection
    # dropout -> identity (eval mode)

    # linear2 + ELU
    h2 = _elu(jnp.dot(h1.astype(mxu_dtype), w2_ref[...],
                      preferred_element_type=jnp.float32) + b2_ref[...])

    # GatedLinearUnit: single fused (H, 2H) projection, slice the f32 result.
    g = jnp.dot(h2.astype(mxu_dtype), wg_ref[...],
                preferred_element_type=jnp.float32) + bg_ref[...]     # (tm, 2H)
    y = jax.nn.sigmoid(g[:, :H]) * g[:, H:] + res

    # LayerNorm over last dim, eps = 1e-5 (PyTorch default), affine.
    mean = jnp.mean(y, axis=-1, keepdims=True)
    centered = y - mean
    var = jnp.mean(centered * centered, axis=-1, keepdims=True)
    y = centered * jax.lax.rsqrt(var + 1e-5) * gamma_ref[...] + beta_ref[...]

    o_ref[...] = y.astype(o_ref.dtype)


def prepare_params(params, mxu_dtype=jnp.bfloat16):
    """One-time weight packing, hoisted out of the per-call path:
    fuse [W1 | Ws] and [b1 | bs], keep the GLU projection fused (H, 2H),
    cast weights to the MXU dtype and biases / LayerNorm params to f32."""
    f32 = jnp.float32
    return dict(
        w1s=jnp.concatenate([params["w1"], params["ws"]], axis=1).astype(mxu_dtype),
        b1s=jnp.concatenate([params["b1"], params["bs"]], axis=1).astype(f32),
        w2=params["w2"].astype(mxu_dtype),
        b2=params["b2"].astype(f32),
        wg=params["wg"].astype(mxu_dtype),
        bg=params["bg"].astype(f32),
        gamma=params["gamma"].astype(f32),
        beta=params["beta"].astype(f32),
        hidden_size=int(params["w1"].shape[1]),
        mxu_dtype=mxu_dtype,
    )


def _pick_tile_rows(M, F, H, x_itemsize, out_itemsize, vmem_budget_bytes, tm):
    rows = _round_up(M, 8)
    if tm is None:
        # Rough per-row VMEM working set: ~12 live f32 H-wide intermediates
        # (h1s / g are 2H wide) plus double-buffered x and out tiles.
        per_row = 12 * H * 4 + 2 * F * x_itemsize + 2 * H * out_itemsize
        tm = max(8, min(1024, vmem_budget_bytes // max(per_row, 1)))
    tm = min(tm, rows)
    # Megacore: v7x shards the "parallel" grid axis across its 2 TensorCores,
    # so keep at least two grid steps whenever there is more than one sublane
    # tile of rows (near-free on v5e/v6e).
    if rows >= 16:
        tm = min(tm, max(8, rows // 2))
    return max(8, (tm // 8) * 8)


def grn_forward(x, prepared, *, tm=None, out_dtype=None):
    """x: (B, T, input_size) -> (B, T, hidden_size) in `out_dtype`
    (defaults to the MXU dtype: bf16 on the fast path, f32 on the exact path)."""
    B, T, F = x.shape
    H = prepared["hidden_size"]
    M = B * T
    mxu_dtype = prepared["mxu_dtype"]
    if out_dtype is None:
        out_dtype = mxu_dtype

    # Generation-aware VMEM sizing (v5e/v6e: 128 MiB, v7x: 64 MiB per TC).
    try:
        vmem_cap = pltpu.get_tpu_info().vmem_capacity_bytes
    except Exception:
        vmem_cap = 64 * 1024 * 1024            # conservative (v7x per-TC)
    vmem_limit = min(vmem_cap // 2, 64 * 1024 * 1024)

    tm = _pick_tile_rows(M, F, H, jnp.dtype(x.dtype).itemsize,
                         jnp.dtype(out_dtype).itemsize, vmem_limit // 2, tm)
    grid = (pl.cdiv(M, tm),)       # no padding: Pallas masks the OOB tail block

    x2d = x.reshape(M, F)          # pure reshape, no cast / pad pass over x

    def run(single_buffer_weights):
        def rep(shape):
            # Grid-invariant weight/bias blocks (index (0, 0) for every step);
            # single-buffer them to halve their VMEM footprint.
            idx = lambda i: (0, 0)
            if single_buffer_weights:
                return pl.BlockSpec(shape, idx, pipeline_mode=pl.Buffered(1))
            return pl.BlockSpec(shape, idx)

        return pl.pallas_call(
            grn_kernel,
            out_shape=jax.ShapeDtypeStruct((M, H), out_dtype),
            grid_spec=pltpu.PrefetchScalarGridSpec(
                num_scalar_prefetch=0,
                grid=grid,
                in_specs=[
                    pl.BlockSpec((tm, F), lambda i: (i, 0)),   # x rows
                    rep((F, 2 * H)),                           # [W1 | Ws]
                    rep((1, 2 * H)),                           # [b1 | bs]
                    rep((H, H)),                               # W2
                    rep((1, H)),                               # b2
                    rep((H, 2 * H)),                           # Wg (GLU, fused)
                    rep((1, 2 * H)),                           # bg
                    rep((1, H)),                               # gamma
                    rep((1, H)),                               # beta
                ],
                out_specs=pl.BlockSpec((tm, H), lambda i: (i, 0)),
            ),
            compiler_params=pltpu.CompilerParams(
                dimension_semantics=("parallel",),
                vmem_limit_bytes=vmem_limit),
        )(x2d, prepared["w1s"], prepared["b1s"], prepared["w2"], prepared["b2"],
          prepared["wg"], prepared["bg"], prepared["gamma"], prepared["beta"])

    try:
        out = run(single_buffer_weights=True)
    except Exception:
        # pl.Buffered(1) (single-buffered resident weights) not supported by
        # this jax/libtpu combo; fall back to default double-buffering.
        out = run(single_buffer_weights=False)

    return out.reshape(B, T, H)


def init_params(key, input_size, hidden_size, dtype=jnp.float32):
    """Deterministic synthetic init. Weights stored as (in, out) so the kernel
    computes x @ W (equivalent to PyTorch's x @ W_pt.T)."""
    ks = jax.random.split(key, 8)

    def lin(k, fan_in, fan_out):
        bound = 1.0 / jnp.sqrt(fan_in)
        kw, kb = jax.random.split(k)
        w = jax.random.uniform(kw, (fan_in, fan_out), dtype, -bound, bound)
        b = jax.random.uniform(kb, (1, fan_out), dtype, -bound, bound)
        return w, b

    w1, b1 = lin(ks[0], input_size, hidden_size)
    w2, b2 = lin(ks[1], hidden_size, hidden_size)
    wg, bg = lin(ks[2], hidden_size, 2 * hidden_size)   # GLU linear: H -> 2H
    ws, bs = lin(ks[3], input_size, hidden_size)        # skip projection
    gamma = jnp.ones((1, hidden_size), dtype)
    beta = jnp.zeros((1, hidden_size), dtype)
    return dict(w1=w1, b1=b1, w2=w2, b2=b2, wg=wg, bg=bg,
                ws=ws, bs=bs, gamma=gamma, beta=beta)


def grn_reference(x, p):
    """Pure-JAX reference (f32) for correctness check."""
    def elu(v):
        return jnp.where(v > 0, v, jnp.exp(jnp.minimum(v, 0.0)) - 1.0)
    h1 = elu(x @ p["w1"] + p["b1"][0])
    h2 = elu(h1 @ p["w2"] + p["b2"][0])
    g = h2 @ p["wg"] + p["bg"][0]
    H = p["w1"].shape[1]
    gated = jax.nn.sigmoid(g[..., :H]) * g[..., H:]
    res = x @ p["ws"] + p["bs"][0]
    y = gated + res
    mean = jnp.mean(y, axis=-1, keepdims=True)
    var = jnp.mean((y - mean) ** 2, axis=-1, keepdims=True)
    return (y - mean) * jax.lax.rsqrt(var + 1e-5) * p["gamma"][0] + p["beta"][0]


if __name__ == "__main__":
    B, T, INPUT_SIZE, HIDDEN_SIZE = 2, 8, 16, 32
    key = jax.random.PRNGKey(0)
    kx, kp = jax.random.split(key)

    x = jax.random.normal(kx, (B, T, INPUT_SIZE), jnp.float32)
    params = init_params(kp, INPUT_SIZE, HIDDEN_SIZE)
    ref = grn_reference(x, params)

    # Exact-semantics path: f32 MXU inputs + f32 output, tight tolerance.
    prepared_f32 = prepare_params(params, mxu_dtype=jnp.float32)
    out_f32 = jax.block_until_ready(grn_forward(x, prepared_f32))
    assert out_f32.shape == (B, T, HIDDEN_SIZE)
    assert out_f32.dtype == jnp.float32
    assert jnp.allclose(out_f32, ref, atol=1e-5, rtol=1e-5), "f32 mismatch vs reference"

    # Fast path (default): bf16 MXU inputs + bf16 output, f32 accumulation and
    # f32 elementwise math inside the kernel.
    prepared_bf16 = prepare_params(params)              # mxu_dtype=bf16
    out_bf16 = jax.block_until_ready(grn_forward(x, prepared_bf16))
    assert out_bf16.shape == (B, T, HIDDEN_SIZE)
    assert jnp.allclose(out_bf16.astype(jnp.float32), ref,
                        atol=5e-2, rtol=5e-2), "bf16 mismatch vs reference"

    # TODO(synk): dropout is eval-mode identity here; training-mode RNG dropout
    # (pltpu.prng_*) is not implemented.
    print("KERNEL_OK")
</pallas_src>

<mosaic_0001>
module attributes {stable_mosaic.version = 11 : i64} {
  func.func @grn_kernel(%arg0: i32, %arg1: memref<8x16xf32, #tpu.memory_space<vmem>>, %arg2: memref<16x64xf32, #tpu.memory_space<vmem>>, %arg3: memref<1x64xf32, #tpu.memory_space<vmem>>, %arg4: memref<32x32xf32, #tpu.memory_space<vmem>>, %arg5: memref<1x32xf32, #tpu.memory_space<vmem>>, %arg6: memref<32x64xf32, #tpu.memory_space<vmem>>, %arg7: memref<1x64xf32, #tpu.memory_space<vmem>>, %arg8: memref<1x32xf32, #tpu.memory_space<vmem>>, %arg9: memref<1x32xf32, #tpu.memory_space<vmem>>, %arg10: memref<8x32xf32, #tpu.memory_space<vmem>>) attributes {dimension_semantics = [#tpu.dimension_semantics<parallel>], iteration_bounds = array<i64: 2>, scalar_prefetch = 0 : i64, scratch_operands = 0 : i64, tpu.core_type = #tpu.core_type<tc>, window_params = [{transform_indices = @transform_0, window_bounds = array<i64: 8, 16>}, {pipeline_mode = #tpu.pipeline_mode<synchronous>, transform_indices = @transform_1, window_bounds = array<i64: 16, 64>}, {pipeline_mode = #tpu.pipeline_mode<synchronous>, transform_indices = @transform_2, window_bounds = array<i64: 1, 64>}, {pipeline_mode = #tpu.pipeline_mode<synchronous>, transform_indices = @transform_3, window_bounds = array<i64: 32, 32>}, {pipeline_mode = #tpu.pipeline_mode<synchronous>, transform_indices = @transform_4, window_bounds = array<i64: 1, 32>}, {pipeline_mode = #tpu.pipeline_mode<synchronous>, transform_indices = @transform_5, window_bounds = array<i64: 32, 64>}, {pipeline_mode = #tpu.pipeline_mode<synchronous>, transform_indices = @transform_6, window_bounds = array<i64: 1, 64>}, {pipeline_mode = #tpu.pipeline_mode<synchronous>, transform_indices = @transform_7, window_bounds = array<i64: 1, 32>}, {pipeline_mode = #tpu.pipeline_mode<synchronous>, transform_indices = @transform_8, window_bounds = array<i64: 1, 32>}, {transform_indices = @transform_9, window_bounds = array<i64: 8, 32>}]} {
    %c0 = arith.constant 0 : index
    %c0_0 = arith.constant 0 : index
    %0 = vector.load %arg1[%c0, %c0_0] : memref<8x16xf32, #tpu.memory_space<vmem>>, vector<8x16xf32>
    %c0_1 = arith.constant 0 : index
    %c0_2 = arith.constant 0 : index
    %1 = vector.load %arg2[%c0_1, %c0_2] : memref<16x64xf32, #tpu.memory_space<vmem>>, vector<16x64xf32>
    %cst = arith.constant dense<0.000000e+00> : vector<8x64xf32>
    %2 = tpu.matmul %0, %1, %cst {dimension_numbers = #tpu.dot_dimension_numbers<[1], [0], [0], [1], [0, 0, 1, 1], [], []>} : vector<8x16xf32>, vector<16x64xf32>, vector<8x64xf32> -> vector<8x64xf32>
    %c0_3 = arith.constant 0 : index
    %c0_4 = arith.constant 0 : index
    %3 = vector.load %arg3[%c0_3, %c0_4] : memref<1x64xf32, #tpu.memory_space<vmem>>, vector<1x64xf32>
    %4 = vector.broadcast %3 : vector<1x64xf32> to vector<8x64xf32>
    %5 = arith.addf %2, %4 : vector<8x64xf32>
    %6 = vector.extract_strided_slice %5 {offsets = [0, 0], sizes = [8, 32], strides = [1, 1]} : vector<8x64xf32> to vector<8x32xf32>
    %cst_5 = arith.constant 0.000000e+00 : f32
    %7 = vector.broadcast %cst_5 : f32 to vector<8x32xf32>
    %8 = arith.cmpf ogt, %6, %7 : vector<8x32xf32>
    %cst_6 = arith.constant 0.000000e+00 : f32
    %9 = vector.broadcast %cst_6 : f32 to vector<8x32xf32>
    %10 = arith.minimumf %6, %9 : vector<8x32xf32>
    %11 = math.exp %10 : vector<8x32xf32>
    %cst_7 = arith.constant 1.000000e+00 : f32
    %12 = vector.broadcast %cst_7 : f32 to vector<8x32xf32>
    %13 = arith.subf %11, %12 : vector<8x32xf32>
    %14 = arith.select %8, %6, %13 : vector<8x32xi1>, vector<8x32xf32>
    %15 = vector.extract_strided_slice %5 {offsets = [0, 32], sizes = [8, 32], strides = [1, 1]} : vector<8x64xf32> to vector<8x32xf32>
    %c0_8 = arith.constant 0 : index
    %c0_9 = arith.constant 0 : index
    %16 = vector.load %arg4[%c0_8, %c0_9] : memref<32x32xf32, #tpu.memory_space<vmem>>, vector<32x32xf32>
    %cst_10 = arith.constant dense<0.000000e+00> : vector<8x32xf32>
    %17 = tpu.matmul %14, %16, %cst_10 {dimension_numbers = #tpu.dot_dimension_numbers<[1], [0], [0], [1], [0, 0, 1, 1], [], []>} : vector<8x32xf32>, vector<32x32xf32>, vector<8x32xf32> -> vector<8x32xf32>
    %c0_11 = arith.constant 0 : index
    %c0_12 = arith.constant 0 : index
    %18 = vector.load %arg5[%c0_11, %c0_12] : memref<1x32xf32, #tpu.memory_space<vmem>>, vector<1x32xf32>
    %19 = vector.broadcast %18 : vector<1x32xf32> to vector<8x32xf32>
    %20 = arith.addf %17, %19 : vector<8x32xf32>
    %cst_13 = arith.constant 0.000000e+00 : f32
    %21 = vector.broadcast %cst_13 : f32 to vector<8x32xf32>
    %22 = arith.cmpf ogt, %20, %21 : vector<8x32xf32>
    %cst_14 = arith.constant 0.000000e+00 : f32
    %23 = vector.broadcast %cst_14 : f32 to vector<8x32xf32>
    %24 = arith.minimumf %20, %23 : vector<8x32xf32>
    %25 = math.exp %24 : vector<8x32xf32>
    %cst_15 = arith.constant 1.000000e+00 : f32
    %26 = vector.broadcast %cst_15 : f32 to vector<8x32xf32>
    %27 = arith.subf %25, %26 : vector<8x32xf32>
    %28 = arith.select %22, %20, %27 : vector<8x32xi1>, vector<8x32xf32>
    %c0_16 = arith.constant 0 : index
    %c0_17 = arith.constant 0 : index
    %29 = vector.load %arg6[%c0_16, %c0_17] : memref<32x64xf32, #tpu.memory_space<vmem>>, vector<32x64xf32>
    %cst_18 = arith.constant dense<0.000000e+00> : vector<8x64xf32>
    %30 = tpu.matmul %28, %29, %cst_18 {dimension_numbers = #tpu.dot_dimension_numbers<[1], [0], [0], [1], [0, 0, 1, 1], [], []>} : vector<8x32xf32>, vector<32x64xf32>, vector<8x64xf32> -> vector<8x64xf32>
    %c0_19 = arith.constant 0 : index
    %c0_20 = arith.constant 0 : index
    %31 = vector.load %arg7[%c0_19, %c0_20] : memref<1x64xf32, #tpu.memory_space<vmem>>, vector<1x64xf32>
    %32 = vector.broadcast %31 : vector<1x64xf32> to vector<8x64xf32>
    %33 = arith.addf %30, %32 : vector<8x64xf32>
    %34 = vector.extract_strided_slice %33 {offsets = [0, 0], sizes = [8, 32], strides = [1, 1]} : vector<8x64xf32> to vector<8x32xf32>
    %35 = arith.negf %34 : vector<8x32xf32>
    %36 = math.exp %35 : vector<8x32xf32>
    %cst_21 = arith.constant 1.000000e+00 : f32
    %37 = vector.broadcast %cst_21 : f32 to vector<8x32xf32>
    %38 = arith.addf %37, %36 : vector<8x32xf32>
    %39 = arith.divf %37, %38 : vector<8x32xf32>
    %40 = vector.extract_strided_slice %33 {offsets = [0, 32], sizes = [8, 32], strides = [1, 1]} : vector<8x64xf32> to vector<8x32xf32>
    %41 = arith.mulf %39, %40 : vector<8x32xf32>
    %42 = arith.addf %41, %15 : vector<8x32xf32>
    %cst_22 = arith.constant dense<0.000000e+00> : vector<8xf32>
    %43 = vector.multi_reduction <add>, %42, %cst_22 [1] : vector<8x32xf32> to vector<8xf32>
    %44 = vector.shape_cast %43 : vector<8xf32> to vector<8x1xf32>
    %cst_23 = arith.constant 3.200000e+01 : f32
    %45 = vector.broadcast %cst_23 : f32 to vector<8x1xf32>
    %46 = arith.divf %44, %45 : vector<8x1xf32>
    %47 = vector.broadcast %46 : vector<8x1xf32> to vector<8x32xf32>
    %48 = arith.subf %42, %47 : vector<8x32xf32>
    %49 = arith.mulf %48, %48 : vector<8x32xf32>
    %cst_24 = arith.constant dense<0.000000e+00> : vector<8xf32>
    %50 = vector.multi_reduction <add>, %49, %cst_24 [1] : vector<8x32xf32> to vector<8xf32>
    %51 = vector.shape_cast %50 : vector<8xf32> to vector<8x1xf32>
    %cst_25 = arith.constant 3.200000e+01 : f32
    %52 = vector.broadcast %cst_25 : f32 to vector<8x1xf32>
    %53 = arith.divf %51, %52 : vector<8x1xf32>
    %cst_26 = arith.constant 9.99999974E-6 : f32
    %54 = vector.broadcast %cst_26 : f32 to vector<8x1xf32>
    %55 = arith.addf %53, %54 : vector<8x1xf32>
    %56 = math.rsqrt %55 : vector<8x1xf32>
    %57 = vector.broadcast %56 : vector<8x1xf32> to vector<8x32xf32>
    %58 = arith.mulf %48, %57 : vector<8x32xf32>
    %c0_27 = arith.constant 0 : index
    %c0_28 = arith.constant 0 : index
    %59 = vector.load %arg8[%c0_27, %c0_28] : memref<1x32xf32, #tpu.memory_space<vmem>>, vector<1x32xf32>
    %60 = vector.broadcast %59 : vector<1x32xf32> to vector<8x32xf32>
    %61 = arith.mulf %58, %60 : vector<8x32xf32>
    %c0_29 = arith.constant 0 : index
    %c0_30 = arith.constant 0 : index
    %62 = vector.load %arg9[%c0_29, %c0_30] : memref<1x32xf32, #tpu.memory_space<vmem>>, vector<1x32xf32>
    %63 = vector.broadcast %62 : vector<1x32xf32> to vector<8x32xf32>
    %64 = arith.addf %61, %63 : vector<8x32xf32>
    %c0_31 = arith.constant 0 : index
    %c0_32 = arith.constant 0 : index
    %65 = vector.load %arg10[%c0_31, %c0_32] : memref<8x32xf32, #tpu.memory_space<vmem>>, vector<8x32xf32>
    tpu.vector_store %arg10[%c0_31, %c0_32], %64 {strides = array<i32>} : memref<8x32xf32, #tpu.memory_space<vmem>>, vector<8x32xf32>,
    return
  }
  func.func @transform_0(%arg0: i32) -> (i32, i32) {
    %c0_i32 = arith.constant 0 : i32
    %c0_i32_0 = arith.constant 0 : i32
    return %arg0, %c0_i32 : i32, i32
  }
  func.func @transform_1(%arg0: i32) -> (i32, i32) {
    %c0_i32 = arith.constant 0 : i32
    %c0_i32_0 = arith.constant 0 : i32
    %c0_i32_1 = arith.constant 0 : i32
    return %c0_i32, %c0_i32_0 : i32, i32
  }
  func.func @transform_2(%arg0: i32) -> (i32, i32) {
    %c0_i32 = arith.constant 0 : i32
    %c0_i32_0 = arith.constant 0 : i32
    %c0_i32_1 = arith.constant 0 : i32
    return %c0_i32, %c0_i32_0 : i32, i32
  }
  func.func @transform_3(%arg0: i32) -> (i32, i32) {
    %c0_i32 = arith.constant 0 : i32
    %c0_i32_0 = arith.constant 0 : i32
    %c0_i32_1 = arith.constant 0 : i32
    return %c0_i32, %c0_i32_0 : i32, i32
  }
  func.func @transform_4(%arg0: i32) -> (i32, i32) {
    %c0_i32 = arith.constant 0 : i32
    %c0_i32_0 = arith.constant 0 : i32
    %c0_i32_1 = arith.constant 0 : i32
    return %c0_i32, %c0_i32_0 : i32, i32
  }
  func.func @transform_5(%arg0: i32) -> (i32, i32) {
    %c0_i32 = arith.constant 0 : i32
    %c0_i32_0 = arith.constant 0 : i32
    %c0_i32_1 = arith.constant 0 : i32
    return %c0_i32, %c0_i32_0 : i32, i32
  }
  func.func @transform_6(%arg0: i32) -> (i32, i32) {
    %c0_i32 = arith.constant 0 : i32
    %c0_i32_0 = arith.constant 0 : i32
    %c0_i32_1 = arith.constant 0 : i32
    return %c0_i32, %c0_i32_0 : i32, i32
  }
  func.func @transform_7(%arg0: i32) -> (i32, i32) {
    %c0_i32 = arith.constant 0 : i32
    %c0_i32_0 = arith.constant 0 : i32
    %c0_i32_1 = arith.constant 0 : i32
    return %c0_i32, %c0_i32_0 : i32, i32
  }
  func.func @transform_8(%arg0: i32) -> (i32, i32) {
    %c0_i32 = arith.constant 0 : i32
    %c0_i32_0 = arith.constant 0 : i32
    %c0_i32_1 = arith.constant 0 : i32
    return %c0_i32, %c0_i32_0 : i32, i32
  }
  func.func @transform_9(%arg0: i32) -> (i32, i32) {
    %c0_i32 = arith.constant 0 : i32
    %c0_i32_0 = arith.constant 0 : i32
    return %arg0, %c0_i32 : i32, i32
  }
}

module attributes {stable_mosaic.version = 11 : i64} {
  func.func @grn_kernel(%arg0: i32, %arg1: memref<8x16xf32, #tpu.memory_space<vmem>>, %arg2: memref<16x64xf32, #tpu.memory_space<vmem>>, %arg3: memref<1x64xf32, #tpu.memory_space<vmem>>, %arg4: memref<32x32xf32, #tpu.memory_space<vmem>>, %arg5: memref<1x32xf32, #tpu.memory_space<vmem>>, %arg6: memref<32x64xf32, #tpu.memory_space<vmem>>, %arg7: memref<1x64xf32, #tpu.memory_space<vmem>>, %arg8: memref<1x32xf32, #tpu.memory_space<vmem>>, %arg9: memref<1x32xf32, #tpu.memory_space<vmem>>, %arg10: memref<8x32xf32, #tpu.memory_space<vmem>>) attributes {dimension_semantics = [#tpu.dimension_semantics<parallel>], iteration_bounds = array<i64: 2>, scalar_prefetch = 0 : i64, scratch_operands = 0 : i64, tpu.core_type = #tpu.core_type<tc>, window_params = [{transform_indices = @transform_0, window_bounds = array<i64: 8, 16>}, {pipeline_mode = #tpu.pipeline_mode<synchronous>, transform_indices = @transform_1, window_bounds = array<i64: 16, 64>}, {pipeline_mode = #tpu.pipeline_mode<synchronous>, transform_indices = @transform_2, window_bounds = array<i64: 1, 64>}, {pipeline_mode = #tpu.pipeline_mode<synchronous>, transform_indices = @transform_3, window_bounds = array<i64: 32, 32>}, {pipeline_mode = #tpu.pipeline_mode<synchronous>, transform_indices = @transform_4, window_bounds = array<i64: 1, 32>}, {pipeline_mode = #tpu.pipeline_mode<synchronous>, transform_indices = @transform_5, window_bounds = array<i64: 32, 64>}, {pipeline_mode = #tpu.pipeline_mode<synchronous>, transform_indices = @transform_6, window_bounds = array<i64: 1, 64>}, {pipeline_mode = #tpu.pipeline_mode<synchronous>, transform_indices = @transform_7, window_bounds = array<i64: 1, 32>}, {pipeline_mode = #tpu.pipeline_mode<synchronous>, transform_indices = @transform_8, window_bounds = array<i64: 1, 32>}, {transform_indices = @transform_9, window_bounds = array<i64: 8, 32>}]} {
    %c0 = arith.constant 0 : index
    %c0_0 = arith.constant 0 : index
    %0 = vector.load %arg1[%c0, %c0_0] : memref<8x16xf32, #tpu.memory_space<vmem>>, vector<8x16xf32>
    %c0_1 = arith.constant 0 : index
    %c0_2 = arith.constant 0 : index
    %1 = vector.load %arg2[%c0_1, %c0_2] : memref<16x64xf32, #tpu.memory_space<vmem>>, vector<16x64xf32>
    %cst = arith.constant dense<0.000000e+00> : vector<8x64xf32>
    %2 = tpu.matmul %0, %1, %cst {dimension_numbers = #tpu.dot_dimension_numbers<[1], [0], [0], [1], [0, 0, 1, 1], [], []>} : vector<8x16xf32>, vector<16x64xf32>, vector<8x64xf32> -> vector<8x64xf32>
    %c0_3 = arith.constant 0 : index
    %c0_4 = arith.constant 0 : index
    %3 = vector.load %arg3[%c0_3, %c0_4] : memref<1x64xf32, #tpu.memory_space<vmem>>, vector<1x64xf32>
    %4 = vector.broadcast %3 : vector<1x64xf32> to vector<8x64xf32>
    %5 = arith.addf %2, %4 : vector<8x64xf32>
    %6 = vector.extract_strided_slice %5 {offsets = [0, 0], sizes = [8, 32], strides = [1, 1]} : vector<8x64xf32> to vector<8x32xf32>
    %cst_5 = arith.constant 0.000000e+00 : f32
    %7 = vector.broadcast %cst_5 : f32 to vector<8x32xf32>
    %8 = arith.cmpf ogt, %6, %7 : vector<8x32xf32>
    %cst_6 = arith.constant 0.000000e+00 : f32
    %9 = vector.broadcast %cst_6 : f32 to vector<8x32xf32>
    %10 = arith.minimumf %6, %9 : vector<8x32xf32>
    %11 = math.exp %10 : vector<8x32xf32>
    %cst_7 = arith.constant 1.000000e+00 : f32
    %12 = vector.broadcast %cst_7 : f32 to vector<8x32xf32>
    %13 = arith.subf %11, %12 : vector<8x32xf32>
    %14 = arith.select %8, %6, %13 : vector<8x32xi1>, vector<8x32xf32>
    %15 = vector.extract_strided_slice %5 {offsets = [0, 32], sizes = [8, 32], strides = [1, 1]} : vector<8x64xf32> to vector<8x32xf32>
    %c0_8 = arith.constant 0 : index
    %c0_9 = arith.constant 0 : index
    %16 = vector.load %arg4[%c0_8, %c0_9] : memref<32x32xf32, #tpu.memory_space<vmem>>, vector<32x32xf32>
    %cst_10 = arith.constant dense<0.000000e+00> : vector<8x32xf32>
    %17 = tpu.matmul %14, %16, %cst_10 {dimension_numbers = #tpu.dot_dimension_numbers<[1], [0], [0], [1], [0, 0, 1, 1], [], []>} : vector<8x32xf32>, vector<32x32xf32>, vector<8x32xf32> -> vector<8x32xf32>
    %c0_11 = arith.constant 0 : index
    %c0_12 = arith.constant 0 : index
    %18 = vector.load %arg5[%c0_11, %c0_12] : memref<1x32xf32, #tpu.memory_space<vmem>>, vector<1x32xf32>
    %19 = vector.broadcast %18 : vector<1x32xf32> to vector<8x32xf32>
    %20 = arith.addf %17, %19 : vector<8x32xf32>
    %cst_13 = arith.constant 0.000000e+00 : f32
    %21 = vector.broadcast %cst_13 : f32 to vector<8x32xf32>
    %22 = arith.cmpf ogt, %20, %21 : vector<8x32xf32>
    %cst_14 = arith.constant 0.000000e+00 : f32
    %23 = vector.broadcast %cst_14 : f32 to vector<8x32xf32>
    %24 = arith.minimumf %20, %23 : vector<8x32xf32>
    %25 = math.exp %24 : vector<8x32xf32>
    %cst_15 = arith.constant 1.000000e+00 : f32
    %26 = vector.broadcast %cst_15 : f32 to vector<8x32xf32>
    %27 = arith.subf %25, %26 : vector<8x32xf32>
    %28 = arith.select %22, %20, %27 : vector<8x32xi1>, vector<8x32xf32>
    %c0_16 = arith.constant 0 : index
    %c0_17 = arith.constant 0 : index
    %29 = vector.load %arg6[%c0_16, %c0_17] : memref<32x64xf32, #tpu.memory_space<vmem>>, vector<32x64xf32>
    %cst_18 = arith.constant dense<0.000000e+00> : vector<8x64xf32>
    %30 = tpu.matmul %28, %29, %cst_18 {dimension_numbers = #tpu.dot_dimension_numbers<[1], [0], [0], [1], [0, 0, 1, 1], [], []>} : vector<8x32xf32>, vector<32x64xf32>, vector<8x64xf32> -> vector<8x64xf32>
    %c0_19 = arith.constant 0 : index
    %c0_20 = arith.constant 0 : index
    %31 = vector.load %arg7[%c0_19, %c0_20] : memref<1x64xf32, #tpu.memory_space<vmem>>, vector<1x64xf32>
    %32 = vector.broadcast %31 : vector<1x64xf32> to vector<8x64xf32>
    %33 = arith.addf %30, %32 : vector<8x64xf32>
    %34 = vector.extract_strided_slice %33 {offsets = [0, 0], sizes = [8, 32], strides = [1, 1]} : vector<8x64xf32> to vector<8x32xf32>
    %35 = arith.negf %34 : vector<8x32xf32>
    %36 = math.exp %35 : vector<8x32xf32>
    %cst_21 = arith.constant 1.000000e+00 : f32
    %37 = vector.broadcast %cst_21 : f32 to vector<8x32xf32>
    %38 = arith.addf %37, %36 : vector<8x32xf32>
    %39 = arith.divf %37, %38 : vector<8x32xf32>
    %40 = vector.extract_strided_slice %33 {offsets = [0, 32], sizes = [8, 32], strides = [1, 1]} : vector<8x64xf32> to vector<8x32xf32>
    %41 = arith.mulf %39, %40 : vector<8x32xf32>
    %42 = arith.addf %41, %15 : vector<8x32xf32>
    %cst_22 = arith.constant dense<0.000000e+00> : vector<8xf32>
    %43 = vector.multi_reduction <add>, %42, %cst_22 [1] : vector<8x32xf32> to vector<8xf32>
    %44 = vector.shape_cast %43 : vector<8xf32> to vector<8x1xf32>
    %cst_23 = arith.constant 3.200000e+01 : f32
    %45 = vector.broadcast %cst_23 : f32 to vector<8x1xf32>
    %46 = arith.divf %44, %45 : vector<8x1xf32>
    %47 = vector.broadcast %46 : vector<8x1xf32> to vector<8x32xf32>
    %48 = arith.subf %42, %47 : vector<8x32xf32>
    %49 = arith.mulf %48, %48 : vector<8x32xf32>
    %cst_24 = arith.constant dense<0.000000e+00> : vector<8xf32>
    %50 = vector.multi_reduction <add>, %49, %cst_24 [1] : vector<8x32xf32> to vector<8xf32>
    %51 = vector.shape_cast %50 : vector<8xf32> to vector<8x1xf32>
    %cst_25 = arith.constant 3.200000e+01 : f32
    %52 = vector.broadcast %cst_25 : f32 to vector<8x1xf32>
    %53 = arith.divf %51, %52 : vector<8x1xf32>
    %cst_26 = arith.constant 9.99999974E-6 : f32
    %54 = vector.broadcast %cst_26 : f32 to vector<8x1xf32>
    %55 = arith.addf %53, %54 : vector<8x1xf32>
    %56 = math.rsqrt %55 : vector<8x1xf32>
    %57 = vector.broadcast %56 : vector<8x1xf32> to vector<8x32xf32>
    %58 = arith.mulf %48, %57 : vector<8x32xf32>
    %c0_27 = arith.constant 0 : index
    %c0_28 = arith.constant 0 : index
    %59 = vector.load %arg8[%c0_27, %c0_28] : memref<1x32xf32, #tpu.memory_space<vmem>>, vector<1x32xf32>
    %60 = vector.broadcast %59 : vector<1x32xf32> to vector<8x32xf32>
    %61 = arith.mulf %58, %60 : vector<8x32xf32>
    %c0_29 = arith.constant 0 : index
    %c0_30 = arith.constant 0 : index
    %62 = vector.load %arg9[%c0_29, %c0_30] : memref<1x32xf32, #tpu.memory_space<vmem>>, vector<1x32xf32>
    %63 = vector.broadcast %62 : vector<1x32xf32> to vector<8x32xf32>
    %64 = arith.addf %61, %63 : vector<8x32xf32>
    %c0_31 = arith.constant 0 : index
    %c0_32 = arith.constant 0 : index
    %65 = vector.load %arg10[%c0_31, %c0_32] : memref<8x32xf32, #tpu.memory_space<vmem>>, vector<8x32xf32>
    tpu.vector_store %arg10[%c0_31, %c0_32], %64 {strides = array<i32>} : memref<8x32xf32, #tpu.memory_space<vmem>>, vector<8x32xf32>,
    return
  }
  func.func @transform_0(%arg0: i32) -> (i32, i32) {
    %c0_i32 = arith.constant 0 : i32
    %c0_i32_0 = arith.constant 0 : i32
    return %arg0, %c0_i32 : i32, i32
  }
  func.func @transform_1(%arg0: i32) -> (i32, i32) {
    %c0_i32 = arith.constant 0 : i32
    %c0_i32_0 = arith.constant 0 : i32
    %c0_i32_1 = arith.constant 0 : i32
    return %c0_i32, %c0_i32_0 : i32, i32
  }
  func.func @transform_2(%arg0: i32) -> (i32, i32) {
    %c0_i32 = arith.constant 0 : i32
    %c0_i32_0 = arith.constant 0 : i32
    %c0_i32_1 = arith.constant 0 : i32
    return %c0_i32, %c0_i32_0 : i32, i32
  }
  func.func @transform_3(%arg0: i32) -> (i32, i32) {
    %c0_i32 = arith.constant 0 : i32
    %c0_i32_0 = arith.constant 0 : i32
    %c0_i32_1 = arith.constant 0 : i32
    return %c0_i32, %c0_i32_0 : i32, i32
  }
  func.func @transform_4(%arg0: i32) -> (i32, i32) {
    %c0_i32 = arith.constant 0 : i32
    %c0_i32_0 = arith.constant 0 : i32
    %c0_i32_1 = arith.constant 0 : i32
    return %c0_i32, %c0_i32_0 : i32, i32
  }
  func.func @transform_5(%arg0: i32) -> (i32, i32) {
    %c0_i32 = arith.constant 0 : i32
    %c0_i32_0 = arith.constant 0 : i32
    %c0_i32_1 = arith.constant 0 : i32
    return %c0_i32, %c0_i32_0 : i32, i32
  }
  func.func @transform_6(%arg0: i32) -> (i32, i32) {
    %c0_i32 = arith.constant 0 : i32
    %c0_i32_0 = arith.constant 0 : i32
    %c0_i32_1 = arith.constant 0 : i32
    return %c0_i32, %c0_i32_0 : i32, i32
  }
  func.func @transform_7(%arg0: i32) -> (i32, i32) {
    %c0_i32 = arith.constant 0 : i32
    %c0_i32_0 = arith.constant 0 : i32
    %c0_i32_1 = arith.constant 0 : i32
    return %c0_i32, %c0_i32_0 : i32, i32
  }
  func.func @transform_8(%arg0: i32) -> (i32, i32) {
    %c0_i32 = arith.constant 0 : i32
    %c0_i32_0 = arith.constant 0 : i32
    %c0_i32_1 = arith.constant 0 : i32
    return %c0_i32, %c0_i32_0 : i32, i32
  }
  func.func @transform_9(%arg0: i32) -> (i32, i32) {
    %c0_i32 = arith.constant 0 : i32
    %c0_i32_0 = arith.constant 0 : i32
    return %arg0, %c0_i32 : i32, i32
  }
}

</mosaic_0001>

<llo_original>
// kernel: tpu_custom_call.1
$region0: #{tpu_custom_call.1}
  #allocation0 [shape = 'u32[]', space=smem, size = 0x4, offset = 0x4, fixed_abs, tag = 'smem constant byte address 0x4 - core index']
  #allocation1 [shape = 'u32[72,128]{1,0:T(1,128)}', space=vmem, size = 0x9000, scoped, tag = 'internal scratch']
  %s0 = inlined_call_operand.hbm [shape: f32[16,16], index: 0, kind: input, shape index: {}]
  %s1 = inlined_call_operand.hbm [shape: f32[16,64], index: 1, kind: input, shape index: {}]
  %s2 = inlined_call_operand.vmem [shape: f32[1,64], index: 2, kind: input, shape index: {}]
  %s3 = inlined_call_operand.hbm [shape: f32[32,32], index: 3, kind: input, shape index: {}]
  %s4 = inlined_call_operand.vmem [shape: f32[1,32], index: 4, kind: input, shape index: {}]
  %s5 = inlined_call_operand.hbm [shape: f32[32,64], index: 5, kind: input, shape index: {}]
  %s6 = inlined_call_operand.vmem [shape: f32[1,64], index: 6, kind: input, shape index: {}]
  %s7 = inlined_call_operand.vmem [shape: f32[1,32], index: 7, kind: input, shape index: {}]
  %s8 = inlined_call_operand.vmem [shape: f32[1,32], index: 8, kind: input, shape index: {}]
  %s9 = inlined_call_operand.hbm [shape: f32[16,32], index: 9, kind: output, shape index: {}]
  %s10 = sld [smem:[#allocation0]]
  $region85: #{tpu_custom_call.1} parent=0
    _
  %s12 = ssub.s32 1, %s10
  %s13 = scalar_select 0, %s12, %s10
  $region1: #{tpu_custom_call.1} parent=0
    #allocation2 [shape = 'u8[8192]{0}', space=vmem, size = 0x2000, scoped, tag = 'input window, operand 0']
    #allocation3 [shape = 's32[2]{0}', space=sflag, size = 0x8, scoped, tag = 'scoped memory for tpu_custom_call.1']
    #allocation4 [shape = 's32[2]{0}', space=sflag, size = 0x8, scoped, tag = 'scoped memory for tpu_custom_call.1']
    #allocation5 [shape = 'u8[8192]{0}', space=vmem, size = 0x2000, scoped, tag = 'input window, operand 1, single buffered']
    #allocation6 [shape = 's32[1]{0}', space=sflag, size = 0x4, scoped, tag = 'scoped memory for tpu_custom_call.1']
    #allocation7 [shape = 'u8[16384]{0}', space=vmem, size = 0x4000, scoped, tag = 'input window, operand 3, single buffered']
    #allocation8 [shape = 'u8[16384]{0}', space=vmem, size = 0x4000, scoped, tag = 'input window, operand 5, single buffered']
    #allocation9 [shape = 's32[1]{0}', space=sflag, size = 0x4, scoped, tag = 'scoped memory for tpu_custom_call.1']
    #allocation10 [shape = 'u8[8192]{0}', space=vmem, size = 0x2000, scoped, tag = 'output window, operand 0']
    %14 = vsyncpa [#allocation3], 0
    %s15 = scalar_lea.sflag [#allocation3], 1
    %16 = vsyncpa %s15, 0
    %17 = vsyncpa [#allocation6], 0
    %18 = vsyncpa [#allocation9], 0
    %19 = vsyncpa [#allocation4], 0
    %s20 = scalar_lea.sflag [#allocation4], 1
    %21 = vsyncpa %s20, 0
    loop: start=0, step=1, limit=4
    $region2: #{tpu_custom_call.1} parent=1 // loop_pre_header
      _
    $region3: #{tpu_custom_call.1} parent=1 // loop_header
      %s23 = sphi 0, %s27
      %p24 = scmp.ge.s32.totalorder %s23, 4
      %s33 = sphi 0, %s35
      %s36 = sphi 0, %s33
      %s37 = sphi 0, %s36
      %s53 = sphi 0, %s37
      %s57 = sphi 0, %s57
      %s59 = sphi 0, %s57
      %s60 = sphi 0, %s59
      %s74 = sphi 0, %s60
      %s78 = sphi 0, %s78
      %s80 = sphi 0, %s78
      %s81 = sphi 0, %s80
      %s95 = sphi 0, %s81
      %s99 = sphi 0, %s99
      %s101 = sphi 0, %s99
      %s102 = sphi 0, %s101
      %s116 = sphi 0, %s102
      %s120 = sphi 0, %s120
      %s122 = sphi 0, %s120
      %s123 = sphi 0, %s122
      %s137 = sphi 0, %s123
      %s141 = sphi 0, %s141
      %s143 = sphi 0, %s141
      %s144 = sphi 0, %s143
      %s158 = sphi 0, %s144
      %s162 = sphi 0, %s162
      %s164 = sphi 0, %s162
      %s165 = sphi 0, %s164
      %s179 = sphi 0, %s165
      %s183 = sphi 0, %s183
      %s185 = sphi 0, %s183
      %s186 = sphi 0, %s185
      %s200 = sphi 0, %s186
      %s204 = sphi 0, %s204
      %s206 = sphi 0, %s204
      %s207 = sphi 0, %s206
      %s221 = sphi 0, %s207
      %s227 = sphi 0, %s229
      %s230 = sphi 0, %s227
      %s231 = sphi 0, %s230
      %s247 = sphi 0, %s231
    $region4: #{tpu_custom_call.1} parent=1 // loop_header_branch
      %26 = sbr.rel (%p24) target = $region8
    $region5: #{tpu_custom_call.1} parent=1 // loop_body
      %s28 = ssub.s32 %s23, 1
      %s29 = ssub.s32 %s23, 2
      %s30 = sadd.s32 %s23, 1
      %s31 = ssub.s32 %s23, %s30
      %p32 = scmp.eq.s32.totalorder %s31, 0
      %s34 = sadd.s32 %s33, 1
      %s35 = scalar_select %p32, %s33, %s34
      %p38 = pneg %p32
      %p39 = scmp.eq.s32.totalorder %s23, 1
      %p40 = por %p38, %p39
      %p41 = scmp.ne.s32.totalorder %s33, %s36
      %p42 = scmp.eq.s32.totalorder %s23, 0
      %p43 = por %p41, %p42
      %p44 = scmp.ne.s32.totalorder %s33, %s36
      %p45 = scmp.eq.s32.totalorder %s28, 1
      %p46 = por %p44, %p45
      %p47 = scmp.ne.s32.totalorder %s36, %s37
      %p48 = scmp.eq.s32.totalorder %s28, 0
      %p49 = por %p47, %p48
      %p50 = scmp.ne.s32.totalorder %s36, %s37
      %p51 = scmp.eq.s32.totalorder %s29, 1
      %p52 = por %p50, %p51
      %p54 = scmp.ne.s32.totalorder %s37, %s53
      %p55 = scmp.eq.s32.totalorder %s29, 0
      %p56 = por %p54, %p55
      %s58 = sadd.s32 %s57, 1
      %p61 = scmp.eq.s32.totalorder %s23, 1
      %p62 = scmp.ne.s32.totalorder %s57, %s59
      %p63 = scmp.eq.s32.totalorder %s23, 0
      %p64 = por %p62, %p63
      %p65 = scmp.ne.s32.totalorder %s57, %s59
      %p66 = scmp.eq.s32.totalorder %s28, 1
      %p67 = por %p65, %p66
      %p68 = scmp.ne.s32.totalorder %s59, %s60
      %p69 = scmp.eq.s32.totalorder %s28, 0
      %p70 = por %p68, %p69
      %p71 = scmp.ne.s32.totalorder %s59, %s60
      %p72 = scmp.eq.s32.totalorder %s29, 1
      %p73 = por %p71, %p72
      %p75 = scmp.ne.s32.totalorder %s60, %s74
      %p76 = scmp.eq.s32.totalorder %s29, 0
      %p77 = por %p75, %p76
      %s79 = sadd.s32 %s78, 1
      %p82 = scmp.eq.s32.totalorder %s23, 1
      %p83 = scmp.ne.s32.totalorder %s78, %s80
      %p84 = scmp.eq.s32.totalorder %s23, 0
      %p85 = por %p83, %p84
      %p86 = scmp.ne.s32.totalorder %s78, %s80
      %p87 = scmp.eq.s32.totalorder %s28, 1
      %p88 = por %p86, %p87
      %p89 = scmp.ne.s32.totalorder %s80, %s81
      %p90 = scmp.eq.s32.totalorder %s28, 0
      %p91 = por %p89, %p90
      %p92 = scmp.ne.s32.totalorder %s80, %s81
      %p93 = scmp.eq.s32.totalorder %s29, 1
      %p94 = por %p92, %p93
      %p96 = scmp.ne.s32.totalorder %s81, %s95
      %p97 = scmp.eq.s32.totalorder %s29, 0
      %p98 = por %p96, %p97
      %s100 = sadd.s32 %s99, 1
      %p103 = scmp.eq.s32.totalorder %s23, 1
      %p104 = scmp.ne.s32.totalorder %s99, %s101
      %p105 = scmp.eq.s32.totalorder %s23, 0
      %p106 = por %p104, %p105
      %p107 = scmp.ne.s32.totalorder %s99, %s101
      %p108 = scmp.eq.s32.totalorder %s28, 1
      %p109 = por %p107, %p108
      %p110 = scmp.ne.s32.totalorder %s101, %s102
      %p111 = scmp.eq.s32.totalorder %s28, 0
      %p112 = por %p110, %p111
      %p113 = scmp.ne.s32.totalorder %s101, %s102
      %p114 = scmp.eq.s32.totalorder %s29, 1
      %p115 = por %p113, %p114
      %p117 = scmp.ne.s32.totalorder %s102, %s116
      %p118 = scmp.eq.s32.totalorder %s29, 0
      %p119 = por %p117, %p118
      %s121 = sadd.s32 %s120, 1
      %p124 = scmp.eq.s32.totalorder %s23, 1
      %p125 = scmp.ne.s32.totalorder %s120, %s122
      %p126 = scmp.eq.s32.totalorder %s23, 0
      %p127 = por %p125, %p126
      %p128 = scmp.ne.s32.totalorder %s120, %s122
      %p129 = scmp.eq.s32.totalorder %s28, 1
      %p130 = por %p128, %p129
      %p131 = scmp.ne.s32.totalorder %s122, %s123
      %p132 = scmp.eq.s32.totalorder %s28, 0
      %p133 = por %p131, %p132
      %p134 = scmp.ne.s32.totalorder %s122, %s123
      %p135 = scmp.eq.s32.totalorder %s29, 1
      %p136 = por %p134, %p135
      %p138 = scmp.ne.s32.totalorder %s123, %s137
      %p139 = scmp.eq.s32.totalorder %s29, 0
      %p140 = por %p138, %p139
      %s142 = sadd.s32 %s141, 1
      %p145 = scmp.eq.s32.totalorder %s23, 1
      %p146 = scmp.ne.s32.totalorder %s141, %s143
      %p147 = scmp.eq.s32.totalorder %s23, 0
      %p148 = por %p146, %p147
      %p149 = scmp.ne.s32.totalorder %s141, %s143
      %p150 = scmp.eq.s32.totalorder %s28, 1
      %p151 = por %p149, %p150
      %p152 = scmp.ne.s32.totalorder %s143, %s144
      %p153 = scmp.eq.s32.totalorder %s28, 0
      %p154 = por %p152, %p153
      %p155 = scmp.ne.s32.totalorder %s143, %s144
      %p156 = scmp.eq.s32.totalorder %s29, 1
      %p157 = por %p155, %p156
      %p159 = scmp.ne.s32.totalorder %s144, %s158
      %p160 = scmp.eq.s32.totalorder %s29, 0
      %p161 = por %p159, %p160
      %s163 = sadd.s32 %s162, 1
      %p166 = scmp.eq.s32.totalorder %s23, 1
      %p167 = scmp.ne.s32.totalorder %s162, %s164
      %p168 = scmp.eq.s32.totalorder %s23, 0
      %p169 = por %p167, %p168
      %p170 = scmp.ne.s32.totalorder %s162, %s164
      %p171 = scmp.eq.s32.totalorder %s28, 1
      %p172 = por %p170, %p171
      %p173 = scmp.ne.s32.totalorder %s164, %s165
      %p174 = scmp.eq.s32.totalorder %s28, 0
      %p175 = por %p173, %p174
      %p176 = scmp.ne.s32.totalorder %s164, %s165
      %p177 = scmp.eq.s32.totalorder %s29, 1
      %p178 = por %p176, %p177
      %p180 = scmp.ne.s32.totalorder %s165, %s179
      %p181 = scmp.eq.s32.totalorder %s29, 0
      %p182 = por %p180, %p181
      %s184 = sadd.s32 %s183, 1
      %p187 = scmp.eq.s32.totalorder %s23, 1
      %p188 = scmp.ne.s32.totalorder %s183, %s185
      %p189 = scmp.eq.s32.totalorder %s23, 0
      %p190 = por %p188, %p189
      %p191 = scmp.ne.s32.totalorder %s183, %s185
      %p192 = scmp.eq.s32.totalorder %s28, 1
      %p193 = por %p191, %p192
      %p194 = scmp.ne.s32.totalorder %s185, %s186
      %p195 = scmp.eq.s32.totalorder %s28, 0
      %p196 = por %p194, %p195
      %p197 = scmp.ne.s32.totalorder %s185, %s186
      %p198 = scmp.eq.s32.totalorder %s29, 1
      %p199 = por %p197, %p198
      %p201 = scmp.ne.s32.totalorder %s186, %s200
      %p202 = scmp.eq.s32.totalorder %s29, 0
      %p203 = por %p201, %p202
      %s205 = sadd.s32 %s204, 1
      %p208 = scmp.eq.s32.totalorder %s23, 1
      %p209 = scmp.ne.s32.totalorder %s204, %s206
      %p210 = scmp.eq.s32.totalorder %s23, 0
      %p211 = por %p209, %p210
      %p212 = scmp.ne.s32.totalorder %s204, %s206
      %p213 = scmp.eq.s32.totalorder %s28, 1
      %p214 = por %p212, %p213
      %p215 = scmp.ne.s32.totalorder %s206, %s207
      %p216 = scmp.eq.s32.totalorder %s28, 0
      %p217 = por %p215, %p216
      %p218 = scmp.ne.s32.totalorder %s206, %s207
      %p219 = scmp.eq.s32.totalorder %s29, 1
      %p220 = por %p218, %p219
      %p222 = scmp.ne.s32.totalorder %s207, %s221
      %p223 = scmp.eq.s32.totalorder %s29, 0
      %p224 = por %p222, %p223
      %s225 = ssub.s32 %s23, %s30
      %p226 = scmp.eq.s32.totalorder %s225, 0
      %s228 = sadd.s32 %s227, 1
      %s229 = scalar_select %p226, %s227, %s228
      %p232 = pneg %p226
      %p233 = scmp.eq.s32.totalorder %s23, 1
      %p234 = por %p232, %p233
      %p235 = scmp.ne.s32.totalorder %s227, %s230
      %p236 = scmp.eq.s32.totalorder %s23, 0
      %p237 = por %p235, %p236
      %p238 = scmp.ne.s32.totalorder %s227, %s230
      %p239 = scmp.eq.s32.totalorder %s28, 1
      %p240 = por %p238, %p239
      %p241 = scmp.ne.s32.totalorder %s230, %s231
      %p242 = scmp.eq.s32.totalorder %s28, 0
      %p243 = por %p241, %p242
      %p244 = scmp.ne.s32.totalorder %s230, %s231
      %p245 = scmp.eq.s32.totalorder %s29, 1
      %p246 = por %p244, %p245
      %p248 = scmp.ne.s32.totalorder %s231, %s247
      %p249 = scmp.eq.s32.totalorder %s29, 0
      %p250 = por %p248, %p249
      %p251 = scmp.le.s32.totalorder 1, %s23
      %p252 = scmp.lt.s32.totalorder %s23, 3
      %p253 = pnand %p251, %p252
      %p254 = pneg %p253
      // Predicated region
      $region9: #{tpu_custom_call.1} parent=5 // pred_check
        _
      $region10: #{tpu_custom_call.1} parent=5 // pred_check_branch
        %256 = sbr.rel (%p253) target = $region12
      $region11: #{tpu_custom_call.1} parent=5 // pred_region
        %s257 = ssub.s32 %s23, 1
        // Predicated region
        $region13: #{tpu_custom_call.1} parent=11 // pred_check
          %p258 = pneg %p70
        $region14: #{tpu_custom_call.1} parent=11 // pred_check_branch
          %260 = sbr.rel (%p258) target = $region16
        $region15: #{tpu_custom_call.1} parent=11 // pred_region
          %262 = vsyncadd [#allocation6], 0
          %s263 = sshll.u32 %s1, 4
          %s264 = int_to_ptr.hbm [resolvable:$true] %s263
          %s265 = sshll.u32 [#allocation5], 4
          %s266 = int_to_ptr.vmem [resolvable:$true] %s265
          %271 = dma.hbm_to_vmem [thread:$0]  %s264, 256, %s266, [#allocation6], 128, 128, 8
        $region16: #{tpu_custom_call.1} parent=11 // pred_fallthru
          _
        // Predicated region
        $region17: #{tpu_custom_call.1} parent=11 // pred_check
          %p272 = pneg %p91
        $region18: #{tpu_custom_call.1} parent=11 // pred_check_branch
          %274 = sbr.rel (%p272) target = $region20
        $region19: #{tpu_custom_call.1} parent=11 // pred_region
          _
        $region20: #{tpu_custom_call.1} parent=11 // pred_fallthru
          _
        // Predicated region
        $region21: #{tpu_custom_call.1} parent=11 // pred_check
          %p275 = pneg %p112
        $region22: #{tpu_custom_call.1} parent=11 // pred_check_branch
          %277 = sbr.rel (%p275) target = $region24
        $region23: #{tpu_custom_call.1} parent=11 // pred_region
          %279 = vsyncadd [#allocation6], 0
          %s280 = sshll.u32 %s3, 4
          %s281 = int_to_ptr.hbm [resolvable:$true] %s280
          %s282 = sshll.u32 [#allocation7], 4
          %s283 = int_to_ptr.vmem [resolvable:$true] %s282
          %288 = dma.hbm_to_vmem [thread:$0]  %s281, 512, %s283, [#allocation6], 128, 128, 8
        $region24: #{tpu_custom_call.1} parent=11 // pred_fallthru
          _
        // Predicated region
        $region25: #{tpu_custom_call.1} parent=11 // pred_check
          %p289 = pneg %p133
        $region26: #{tpu_custom_call.1} parent=11 // pred_check_branch
          %291 = sbr.rel (%p289) target = $region28
        $region27: #{tpu_custom_call.1} parent=11 // pred_region
          _
        $region28: #{tpu_custom_call.1} parent=11 // pred_fallthru
          _
        // Predicated region
        $region29: #{tpu_custom_call.1} parent=11 // pred_check
          %p292 = pneg %p154
        $region30: #{tpu_custom_call.1} parent=11 // pred_check_branch
          %294 = sbr.rel (%p292) target = $region32
        $region31: #{tpu_custom_call.1} parent=11 // pred_region
          %296 = vsyncadd [#allocation9], 0
          %s297 = sshll.u32 %s5, 4
          %s298 = int_to_ptr.hbm [resolvable:$true] %s297
          %s299 = sshll.u32 [#allocation8], 4
          %s300 = int_to_ptr.vmem [resolvable:$true] %s299
          %305 = dma.hbm_to_vmem [thread:$0]  %s298, 512, %s300, [#allocation9], 128, 128, 8
        $region32: #{tpu_custom_call.1} parent=11 // pred_fallthru
          _
        // Predicated region
        $region33: #{tpu_custom_call.1} parent=11 // pred_check
          %p306 = pneg %p175
        $region34: #{tpu_custom_call.1} parent=11 // pred_check_branch
          %308 = sbr.rel (%p306) target = $region36
        $region35: #{tpu_custom_call.1} parent=11 // pred_region
          _
        $region36: #{tpu_custom_call.1} parent=11 // pred_fallthru
          _
        // Predicated region
        $region37: #{tpu_custom_call.1} parent=11 // pred_check
          %p309 = pneg %p196
        $region38: #{tpu_custom_call.1} parent=11 // pred_check_branch
          %311 = sbr.rel (%p309) target = $region40
        $region39: #{tpu_custom_call.1} parent=11 // pred_region
          _
        $region40: #{tpu_custom_call.1} parent=11 // pred_fallthru
          _
        // Predicated region
        $region41: #{tpu_custom_call.1} parent=11 // pred_check
          %p312 = pneg %p217
        $region42: #{tpu_custom_call.1} parent=11 // pred_check_branch
          %314 = sbr.rel (%p312) target = $region44
        $region43: #{tpu_custom_call.1} parent=11 // pred_region
          _
        $region44: #{tpu_custom_call.1} parent=11 // pred_fallthru
          _
      $region12: #{tpu_custom_call.1} parent=5 // pred_fallthru
        _
      %p315 = scmp.lt.s32.totalorder %s23, 2
      // Predicated region
      $region45: #{tpu_custom_call.1} parent=5 // pred_check
        %p316 = pneg %p315
      $region46: #{tpu_custom_call.1} parent=5 // pred_check_branch
        %318 = sbr.rel (%p316) target = $region48
      $region47: #{tpu_custom_call.1} parent=5 // pred_region
        // Predicated region
        $region49: #{tpu_custom_call.1} parent=47 // pred_check
          %p319 = pneg %p43
        $region50: #{tpu_custom_call.1} parent=47 // pred_check_branch
          %321 = sbr.rel (%p319) target = $region52
        $region51: #{tpu_custom_call.1} parent=47 // pred_region
          %s322 = sand.u32 %s33, 1
          %s323 = scalar_lea.sflag [#allocation3], %s322
          %s324 = sand.u32 %s33, 1
          %s325 = smul.addr %s324, 8
          %s326 = scalar_lea.vmem [#allocation2], %s325
          %328 = vsyncadd %s323, 0
          %s329 = smul.addr %s23, 8
          %s330 = scalar_lea.hbm %s0, %s329
          %s332 = sshll.u32 %s330, 4
          %s333 = int_to_ptr.hbm [resolvable:$true] %s332
          %s334 = sshll.u32 %s326, 4
          %s335 = int_to_ptr.vmem [resolvable:$true] %s334
          %337 = dma.hbm_to_vmem [thread:$0]  %s333, 128, %s335, %s323
        $region52: #{tpu_custom_call.1} parent=47 // pred_fallthru
          _
      $region48: #{tpu_custom_call.1} parent=5 // pred_fallthru
        _
      %p338 = scmp.le.s32.totalorder 1, %s23
      %p339 = scmp.lt.s32.totalorder %s23, 3
      %p340 = pnand %p338, %p339
      %p341 = pneg %p340
      // Predicated region
      $region53: #{tpu_custom_call.1} parent=5 // pred_check
        _
      $region54: #{tpu_custom_call.1} parent=5 // pred_check_branch
        %343 = sbr.rel (%p340) target = $region56
      $region55: #{tpu_custom_call.1} parent=5 // pred_region
        %s344 = ssub.s32 %s23, 1
        %s345 = sand.u32 %s36, 1
        %s346 = scalar_lea.sflag [#allocation3], %s345
        %s347 = sand.u32 %s36, 1
        %s348 = smul.addr %s347, 8
        %s349 = scalar_lea.vmem [#allocation2], %s348
        // Predicated region
        $region57: #{tpu_custom_call.1} parent=55 // pred_check
          %p350 = pneg %p49
        $region58: #{tpu_custom_call.1} parent=55 // pred_check_branch
          %352 = sbr.rel (%p350) target = $region60
        $region59: #{tpu_custom_call.1} parent=55 // pred_region
          %354 = dma.done %s346, 128
        $region60: #{tpu_custom_call.1} parent=55 // pred_fallthru
          _
        // Predicated region
        $region61: #{tpu_custom_call.1} parent=55 // pred_check
          %p355 = pneg %p70
        $region62: #{tpu_custom_call.1} parent=55 // pred_check_branch
          %357 = sbr.rel (%p355) target = $region64
        $region63: #{tpu_custom_call.1} parent=55 // pred_region
          %359 = dma.done [#allocation6], 256
        $region64: #{tpu_custom_call.1} parent=55 // pred_fallthru
          _
        // Predicated region
        $region65: #{tpu_custom_call.1} parent=55 // pred_check
          %p360 = pneg %p112
        $region66: #{tpu_custom_call.1} parent=55 // pred_check_branch
          %362 = sbr.rel (%p360) target = $region68
        $region67: #{tpu_custom_call.1} parent=55 // pred_region
          %364 = dma.done [#allocation6], 512
        $region68: #{tpu_custom_call.1} parent=55 // pred_fallthru
          _
        // Predicated region
        $region69: #{tpu_custom_call.1} parent=55 // pred_check
          %p365 = pneg %p154
        $region70: #{tpu_custom_call.1} parent=55 // pred_check_branch
          %367 = sbr.rel (%p365) target = $region72
        $region71: #{tpu_custom_call.1} parent=55 // pred_region
          %369 = dma.done [#allocation9], 512
        $region72: #{tpu_custom_call.1} parent=55 // pred_fallthru
          _
        %s370 = sand.u32 %s36, 1
        %s371 = scalar_lea.sflag [#allocation3], %s370
        %s372 = sand.u32 %s36, 1
        %s373 = smul.addr %s372, 8
        %s374 = scalar_lea.vmem [#allocation2], %s373
        %p375 = pneg %p49
        %p376 = pneg %p46
        %p377 = pneg %p70
        %p378 = pneg %p67
        %p379 = pneg %p91
        %p380 = pneg %p88
        %p381 = pneg %p112
        %p382 = pneg %p109
        %p383 = pneg %p133
        %p384 = pneg %p130
        %p385 = pneg %p154
        %p386 = pneg %p151
        %p387 = pneg %p175
        %p388 = pneg %p172
        %p389 = pneg %p196
        %p390 = pneg %p193
        %p391 = pneg %p217
        %p392 = pneg %p214
        %p393 = pneg %p243
        %p394 = pneg %p240
        %s395 = sand.u32 %s230, 1
        %s396 = scalar_lea.sflag [#allocation4], %s395
        %s397 = sand.u32 %s230, 1
        %s398 = smul.addr %s397, 8
        %s399 = scalar_lea.vmem [#allocation10], %s398
        %v400 = vld [vmem:[%s349] sm:$0xff]
        %v401 = vld [vmem:[#allocation5] sm:$0xff]
        %v402 = vld [vmem:[#allocation5 + $0x8] sm:$0xff]
        %v403 = vld [vmem:[%s2] sm:$0x1]
        %v405 = vperm.slane %v403, 0
        %vm407 = vcmask 130048
        %v409 = vsel %vm407, %v400, 0
        %411 = vmatpush.msra.mxu0 0.0
        %412 = vmatpush.msra.mxu0 0.0
        %413 = vmatpush.msra.mxu0 0.0
        %414 = vmatpush.msra.mxu0 0.0
        %415 = vmatpush.msra.mxu0 0.0
        %416 = vmatpush.msra.mxu0 0.0
        %417 = vmatpush.msra.mxu0 0.0
        %418 = vmatpush.msra.mxu0 0.0
        %419 = vmatpush.msra.mxu0 0.0
        %420 = vmatpush.msra.mxu0 0.0
        %421 = vmatpush.msra.mxu0 0.0
        %422 = vmatpush.msra.mxu0 0.0
        %423 = vmatpush.msra.mxu0 0.0
        %424 = vmatpush.msra.mxu0 0.0
        %425 = vmatpush.msra.mxu0 %v402
        %426 = vmatpush.msra.mxu0 %v401
        %427 = vmatmul.f32.gmra.mxu0 %v409
        %v428 = vpop.f32.mrf.mxu0
        %v429 = vadd.f32 %v405, %v428
        %430 = vdwg.mxu0
        %vm431 = vcmp.gt.f32.partialorder %v429, 0.0
        %v432 = vmin.f32 %v429, 0.0
        %v433 = vmul.f32 %v432, 1.442695
        %v434 = vpow.pop %v433
        %v435 = vsub.f32 %v434, 1.0
        %v436 = vsel %vm431, %v429, %v435
        %v437 = vld [vmem:[#allocation7] sm:$0xff]
        %v438 = vld [vmem:[#allocation7 + $0x8] sm:$0xff]
        %v439 = vld [vmem:[#allocation7 + $0x10] sm:$0xff]
        %v440 = vld [vmem:[#allocation7 + $0x18] sm:$0xff]
        %v441 = vld [vmem:[%s4] sm:$0x1]
        %v443 = vperm.slane %v441, 0
        %vm445 = vcmask 261120
        %v447 = vsel %vm445, %v436, 0
        %449 = vmatpush.msra.mxu0 0.0
        %450 = vmatpush.msra.mxu0 0.0
        %451 = vmatpush.msra.mxu0 0.0
        %452 = vmatpush.msra.mxu0 0.0
        %453 = vmatpush.msra.mxu0 0.0
        %454 = vmatpush.msra.mxu0 0.0
        %455 = vmatpush.msra.mxu0 0.0
        %456 = vmatpush.msra.mxu0 0.0
        %457 = vmatpush.msra.mxu0 0.0
        %458 = vmatpush.msra.mxu0 0.0
        %459 = vmatpush.msra.mxu0 0.0
        %460 = vmatpush.msra.mxu0 0.0
        %461 = vmatpush.msra.mxu0 %v440
        %462 = vmatpush.msra.mxu0 %v439
        %463 = vmatpush.msra.mxu0 %v438
        %464 = vmatpush.msra.mxu0 %v437
        %465 = vmatmul.f32.gmra.mxu0 %v447
        %v466 = vpop.f32.mrf.mxu0
        %v467 = vadd.f32 %v443, %v466
        %468 = vdwg.mxu0
        %vm469 = vcmp.gt.f32.partialorder %v467, 0.0
        %v470 = vmin.f32 %v467, 0.0
        %v471 = vmul.f32 %v470, 1.442695
        %v472 = vpow.pop %v471
        %v473 = vsub.f32 %v472, 1.0
        %v474 = vsel %vm469, %v467, %v473
        %v475 = vld [vmem:[#allocation8] sm:$0xff]
        %v476 = vld [vmem:[#allocation8 + $0x8] sm:$0xff]
        %v477 = vld [vmem:[#allocation8 + $0x10] sm:$0xff]
        %v478 = vld [vmem:[#allocation8 + $0x18] sm:$0xff]
        %v479 = vld [vmem:[%s6] sm:$0x1]
        %v481 = vperm.slane %v479, 0
        %v484 = vsel %vm445, %v474, 0
        %486 = vmatpush.msra.mxu0 0.0
        %487 = vmatpush.msra.mxu0 0.0
        %488 = vmatpush.msra.mxu0 0.0
        %489 = vmatpush.msra.mxu0 0.0
        %490 = vmatpush.msra.mxu0 0.0
        %491 = vmatpush.msra.mxu0 0.0
        %492 = vmatpush.msra.mxu0 0.0
        %493 = vmatpush.msra.mxu0 0.0
        %494 = vmatpush.msra.mxu0 0.0
        %495 = vmatpush.msra.mxu0 0.0
        %496 = vmatpush.msra.mxu0 0.0
        %497 = vmatpush.msra.mxu0 0.0
        %498 = vmatpush.msra.mxu0 %v478
        %499 = vmatpush.msra.mxu0 %v477
        %500 = vmatpush.msra.mxu0 %v476
        %501 = vmatpush.msra.mxu0 %v475
        %502 = vmatmul.f32.gmra.mxu0 %v484
        %v503 = vpop.f32.mrf.mxu0
        %v504 = vadd.f32 %v481, %v503
        %505 = vdwg.mxu0
        %v506 = vxor.u32 %v504, 2147483648
        %v507 = vmul.f32 %v506, 1.442695
        %v508 = vpow.pop %v507
        %v509 = vadd.f32 %v508, 1.0
        %v510 = vrcp.pop %v509
        %v511 = vmul.f32 %v509, %v510
        %v512 = vsub.f32 1.0, %v511
        %v513 = vmul.f32 %v510, %v512
        %v514 = vadd.f32 %v510, %v513
        %vm515 = vweird.f32 %v509
        %vm516 = vweird.f32 %v510
        %vm517 = vmor %vm515, %vm516
        %v518 = vsel %vm517, %v510, %v514
        %v519 = vand.u32 2147483647, %v509
        %vm520 = vcmp.eq.f32.partialorder %v519, 8.507059e+37
        %v521 = vand.u32 %v509, 2147483648
        %v522 = vor.u32 1.1754944e-38, %v521
        %v523 = vsel %vm520, %v522, %v518
        %v524 = vmul.f32 1.0, %v523
        %526 = vrot.lane.b32.xlu0 %v504, 96
        %v527 = vpop.permute.xlu0 %526
        %v529 = vmul.f32 %v524, %v527
        %531 = vrot.lane.b32.xlu0 %v429, 96
        %v532 = vpop.permute.xlu0 %531
        %v534 = vadd.f32 %v529, %v532
        %v535 = vsel %vm445, %v534, 0.0
        %536 = vadd.xlane.f32.xlu0 %v535
        %v537 = vpop.xlane.xlu0 %536
        %v538 = vrcp.pop 32.0
        %v539 = vmul.f32 32.0, %v538
        %v540 = vsub.f32 1.0, %v539
        %v541 = vmul.f32 %v538, %v540
        %v542 = vadd.f32 %v538, %v541
        %vm543 = vweird.f32 %v538
        %v544 = vsel %vm543, %v538, %v542
        %v545 = vmul.f32 %v537, %v544
        %v546 = vsub.f32 %v534, %v545
        %v547 = vmul.f32 %v546, %v546
        %v548 = vsel %vm445, %v547, 0.0
        %549 = vadd.xlane.f32.xlu0 %v548
        %v550 = vpop.xlane.xlu0 %549
        %v551 = vmul.f32 %v550, %v544
        %v552 = vadd.f32 %v551, 1e-05
        %v553 = vrsqrt.pop %v552
        %v554 = vmul.f32 %v553, %v552
        %v555 = vmul.f32 %v554, %v553
        %v556 = vmul.f32 0.5, %v555
        %v557 = vsub.f32 1.5, %v556
        %v558 = vmul.f32 %v553, %v557
        %vm559 = vweird.f32 %v552
        %vm560 = vweird.f32 %v553
        %vm561 = vmor %vm559, %vm560
        %v562 = vsel %vm561, %v553, %v558
        %v563 = vmul.f32 %v546, %v562
        %v564 = vld [vmem:[%s7] sm:$0x1]
        %v566 = vperm.slane %v564, 0
        %v568 = vmul.f32 %v563, %v566
        %v569 = vld [vmem:[%s8] sm:$0x1]
        %v571 = vperm.slane %v569, 0
        %v573 = vadd.f32 %v568, %v571
        %574 = vst.msk [vmem:[%s399] sm:$0xff] %vm445, %v573
        %s575 = sand.u32 %s230, 1
        %s576 = scalar_lea.sflag [#allocation4], %s575
        %s577 = sand.u32 %s230, 1
        %s578 = smul.addr %s577, 8
        %s579 = scalar_lea.vmem [#allocation10], %s578
        // Predicated region
        $region73: #{tpu_custom_call.1} parent=55 // pred_check
          %p580 = pneg %p240
        $region74: #{tpu_custom_call.1} parent=55 // pred_check_branch
          %582 = sbr.rel (%p580) target = $region76
        $region75: #{tpu_custom_call.1} parent=55 // pred_region
          %584 = vsyncadd %s576, 0
          %s585 = smul.addr %s28, 8
          %s586 = scalar_lea.hbm %s9, %s585
          %s588 = sshll.u32 %s579, 4
          %s589 = int_to_ptr.vmem [resolvable:$true] %s588
          %s590 = sshll.u32 %s586, 4
          %s591 = int_to_ptr.hbm [resolvable:$true] %s590
          %593 = dma.vmem_to_hbm [thread:$0]  %s589, 128, %s591, %s576
        $region76: #{tpu_custom_call.1} parent=55 // pred_fallthru
          _
      $region56: #{tpu_custom_call.1} parent=5 // pred_fallthru
        _
      %p594 = scmp.le.s32.totalorder 2, %s23
      // Predicated region
      $region77: #{tpu_custom_call.1} parent=5 // pred_check
        %p595 = pneg %p594
      $region78: #{tpu_custom_call.1} parent=5 // pred_check_branch
        %597 = sbr.rel (%p595) target = $region80
      $region79: #{tpu_custom_call.1} parent=5 // pred_region
        %s598 = ssub.s32 %s23, 2
        // Predicated region
        $region81: #{tpu_custom_call.1} parent=79 // pred_check
          %p599 = pneg %p246
        $region82: #{tpu_custom_call.1} parent=79 // pred_check_branch
          %601 = sbr.rel (%p599) target = $region84
        $region83: #{tpu_custom_call.1} parent=79 // pred_region
          %s602 = sand.u32 %s231, 1
          %s603 = scalar_lea.sflag [#allocation4], %s602
          %s604 = sand.u32 %s231, 1
          %s605 = smul.addr %s604, 8
          %s606 = scalar_lea.vmem [#allocation10], %s605
          %608 = dma.done %s603, 128
        $region84: #{tpu_custom_call.1} parent=79 // pred_fallthru
          _
      $region80: #{tpu_custom_call.1} parent=5 // pred_fallthru
        _
    $region6: #{tpu_custom_call.1} parent=1 // loop_footer
      %s27 = sadd.s32 1, %s23
    $region7: #{tpu_custom_call.1} parent=1 // loop_footer_branch
      %22 = sbr.rel target = $region3
    $region8: #{tpu_custom_call.1} parent=1 // loop_exit
      _
    %609 = vsyncpa [#allocation3], 1
    %s610 = scalar_lea.sflag [#allocation3], 1
    %611 = vsyncpa %s610, 1
    %612 = vsyncpa [#allocation6], 1
    %613 = vsyncpa [#allocation9], 1
    %614 = vsyncpa [#allocation4], 1
    %s615 = scalar_lea.sflag [#allocation4], 1
    %616 = vsyncpa %s615, 1

// kernel: tpu_custom_call.1
$region0: #{tpu_custom_call.1}
  #allocation0 [shape = 'u32[]', space=smem, size = 0x4, offset = 0x4, fixed_abs, tag = 'smem constant byte address 0x4 - core index']
  #allocation1 [shape = 'u32[72,128]{1,0:T(1,128)}', space=vmem, size = 0x9000, scoped, tag = 'internal scratch']
  %s0 = inlined_call_operand.hbm [shape: f32[16,16], index: 0, kind: input, shape index: {}]
  %s1 = inlined_call_operand.hbm [shape: f32[16,64], index: 1, kind: input, shape index: {}]
  %s2 = inlined_call_operand.vmem [shape: f32[1,64], index: 2, kind: input, shape index: {}]
  %s3 = inlined_call_operand.hbm [shape: f32[32,32], index: 3, kind: input, shape index: {}]
  %s4 = inlined_call_operand.vmem [shape: f32[1,32], index: 4, kind: input, shape index: {}]
  %s5 = inlined_call_operand.hbm [shape: f32[32,64], index: 5, kind: input, shape index: {}]
  %s6 = inlined_call_operand.vmem [shape: f32[1,64], index: 6, kind: input, shape index: {}]
  %s7 = inlined_call_operand.vmem [shape: f32[1,32], index: 7, kind: input, shape index: {}]
  %s8 = inlined_call_operand.vmem [shape: f32[1,32], index: 8, kind: input, shape index: {}]
  %s9 = inlined_call_operand.hbm [shape: f32[16,32], index: 9, kind: output, shape index: {}]
  %s10 = sld [smem:[#allocation0]]
  $region85: #{tpu_custom_call.1} parent=0
    _
  %s12 = ssub.s32 1, %s10
  %s13 = scalar_select 0, %s12, %s10
  $region1: #{tpu_custom_call.1} parent=0
    #allocation2 [shape = 'u8[8192]{0}', space=vmem, size = 0x2000, scoped, tag = 'input window, operand 0']
    #allocation3 [shape = 's32[2]{0}', space=sflag, size = 0x8, scoped, tag = 'scoped memory for tpu_custom_call.1']
    #allocation4 [shape = 's32[2]{0}', space=sflag, size = 0x8, scoped, tag = 'scoped memory for tpu_custom_call.1']
    #allocation5 [shape = 'u8[8192]{0}', space=vmem, size = 0x2000, scoped, tag = 'input window, operand 1, single buffered']
    #allocation6 [shape = 's32[1]{0}', space=sflag, size = 0x4, scoped, tag = 'scoped memory for tpu_custom_call.1']
    #allocation7 [shape = 'u8[16384]{0}', space=vmem, size = 0x4000, scoped, tag = 'input window, operand 3, single buffered']
    #allocation8 [shape = 'u8[16384]{0}', space=vmem, size = 0x4000, scoped, tag = 'input window, operand 5, single buffered']
    #allocation9 [shape = 's32[1]{0}', space=sflag, size = 0x4, scoped, tag = 'scoped memory for tpu_custom_call.1']
    #allocation10 [shape = 'u8[8192]{0}', space=vmem, size = 0x2000, scoped, tag = 'output window, operand 0']
    %14 = vsyncpa [#allocation3], 0
    %s15 = scalar_lea.sflag [#allocation3], 1
    %16 = vsyncpa %s15, 0
    %17 = vsyncpa [#allocation6], 0
    %18 = vsyncpa [#allocation9], 0
    %19 = vsyncpa [#allocation4], 0
    %s20 = scalar_lea.sflag [#allocation4], 1
    %21 = vsyncpa %s20, 0
    loop: start=0, step=1, limit=4
    $region2: #{tpu_custom_call.1} parent=1 // loop_pre_header
      _
    $region3: #{tpu_custom_call.1} parent=1 // loop_header
      %s23 = sphi 0, %s27
      %p24 = scmp.ge.s32.totalorder %s23, 4
      %s33 = sphi 0, %s35
      %s36 = sphi 0, %s33
      %s37 = sphi 0, %s36
      %s53 = sphi 0, %s37
      %s57 = sphi 0, %s57
      %s59 = sphi 0, %s57
      %s60 = sphi 0, %s59
      %s74 = sphi 0, %s60
      %s78 = sphi 0, %s78
      %s80 = sphi 0, %s78
      %s81 = sphi 0, %s80
      %s95 = sphi 0, %s81
      %s99 = sphi 0, %s99
      %s101 = sphi 0, %s99
      %s102 = sphi 0, %s101
      %s116 = sphi 0, %s102
      %s120 = sphi 0, %s120
      %s122 = sphi 0, %s120
      %s123 = sphi 0, %s122
      %s137 = sphi 0, %s123
      %s141 = sphi 0, %s141
      %s143 = sphi 0, %s141
      %s144 = sphi 0, %s143
      %s158 = sphi 0, %s144
      %s162 = sphi 0, %s162
      %s164 = sphi 0, %s162
      %s165 = sphi 0, %s164
      %s179 = sphi 0, %s165
      %s183 = sphi 0, %s183
      %s185 = sphi 0, %s183
      %s186 = sphi 0, %s185
      %s200 = sphi 0, %s186
      %s204 = sphi 0, %s204
      %s206 = sphi 0, %s204
      %s207 = sphi 0, %s206
      %s221 = sphi 0, %s207
      %s227 = sphi 0, %s229
      %s230 = sphi 0, %s227
      %s231 = sphi 0, %s230
      %s247 = sphi 0, %s231
    $region4: #{tpu_custom_call.1} parent=1 // loop_header_branch
      %26 = sbr.rel (%p24) target = $region8
    $region5: #{tpu_custom_call.1} parent=1 // loop_body
      %s28 = ssub.s32 %s23, 1
      %s29 = ssub.s32 %s23, 2
      %s30 = sadd.s32 %s23, 1
      %s31 = ssub.s32 %s23, %s30
      %p32 = scmp.eq.s32.totalorder %s31, 0
      %s34 = sadd.s32 %s33, 1
      %s35 = scalar_select %p32, %s33, %s34
      %p38 = pneg %p32
      %p39 = scmp.eq.s32.totalorder %s23, 1
      %p40 = por %p38, %p39
      %p41 = scmp.ne.s32.totalorder %s33, %s36
      %p42 = scmp.eq.s32.totalorder %s23, 0
      %p43 = por %p41, %p42
      %p44 = scmp.ne.s32.totalorder %s33, %s36
      %p45 = scmp.eq.s32.totalorder %s28, 1
      %p46 = por %p44, %p45
      %p47 = scmp.ne.s32.totalorder %s36, %s37
      %p48 = scmp.eq.s32.totalorder %s28, 0
      %p49 = por %p47, %p48
      %p50 = scmp.ne.s32.totalorder %s36, %s37
      %p51 = scmp.eq.s32.totalorder %s29, 1
      %p52 = por %p50, %p51
      %p54 = scmp.ne.s32.totalorder %s37, %s53
      %p55 = scmp.eq.s32.totalorder %s29, 0
      %p56 = por %p54, %p55
      %s58 = sadd.s32 %s57, 1
      %p61 = scmp.eq.s32.totalorder %s23, 1
      %p62 = scmp.ne.s32.totalorder %s57, %s59
      %p63 = scmp.eq.s32.totalorder %s23, 0
      %p64 = por %p62, %p63
      %p65 = scmp.ne.s32.totalorder %s57, %s59
      %p66 = scmp.eq.s32.totalorder %s28, 1
      %p67 = por %p65, %p66
      %p68 = scmp.ne.s32.totalorder %s59, %s60
      %p69 = scmp.eq.s32.totalorder %s28, 0
      %p70 = por %p68, %p69
      %p71 = scmp.ne.s32.totalorder %s59, %s60
      %p72 = scmp.eq.s32.totalorder %s29, 1
      %p73 = por %p71, %p72
      %p75 = scmp.ne.s32.totalorder %s60, %s74
      %p76 = scmp.eq.s32.totalorder %s29, 0
      %p77 = por %p75, %p76
      %s79 = sadd.s32 %s78, 1
      %p82 = scmp.eq.s32.totalorder %s23, 1
      %p83 = scmp.ne.s32.totalorder %s78, %s80
      %p84 = scmp.eq.s32.totalorder %s23, 0
      %p85 = por %p83, %p84
      %p86 = scmp.ne.s32.totalorder %s78, %s80
      %p87 = scmp.eq.s32.totalorder %s28, 1
      %p88 = por %p86, %p87
      %p89 = scmp.ne.s32.totalorder %s80, %s81
      %p90 = scmp.eq.s32.totalorder %s28, 0
      %p91 = por %p89, %p90
      %p92 = scmp.ne.s32.totalorder %s80, %s81
      %p93 = scmp.eq.s32.totalorder %s29, 1
      %p94 = por %p92, %p93
      %p96 = scmp.ne.s32.totalorder %s81, %s95
      %p97 = scmp.eq.s32.totalorder %s29, 0
      %p98 = por %p96, %p97
      %s100 = sadd.s32 %s99, 1
      %p103 = scmp.eq.s32.totalorder %s23, 1
      %p104 = scmp.ne.s32.totalorder %s99, %s101
      %p105 = scmp.eq.s32.totalorder %s23, 0
      %p106 = por %p104, %p105
      %p107 = scmp.ne.s32.totalorder %s99, %s101
      %p108 = scmp.eq.s32.totalorder %s28, 1
      %p109 = por %p107, %p108
      %p110 = scmp.ne.s32.totalorder %s101, %s102
      %p111 = scmp.eq.s32.totalorder %s28, 0
      %p112 = por %p110, %p111
      %p113 = scmp.ne.s32.totalorder %s101, %s102
      %p114 = scmp.eq.s32.totalorder %s29, 1
      %p115 = por %p113, %p114
      %p117 = scmp.ne.s32.totalorder %s102, %s116
      %p118 = scmp.eq.s32.totalorder %s29, 0
      %p119 = por %p117, %p118
      %s121 = sadd.s32 %s120, 1
      %p124 = scmp.eq.s32.totalorder %s23, 1
      %p125 = scmp.ne.s32.totalorder %s120, %s122
      %p126 = scmp.eq.s32.totalorder %s23, 0
      %p127 = por %p125, %p126
      %p128 = scmp.ne.s32.totalorder %s120, %s122
      %p129 = scmp.eq.s32.totalorder %s28, 1
      %p130 = por %p128, %p129
      %p131 = scmp.ne.s32.totalorder %s122, %s123
      %p132 = scmp.eq.s32.totalorder %s28, 0
      %p133 = por %p131, %p132
      %p134 = scmp.ne.s32.totalorder %s122, %s123
      %p135 = scmp.eq.s32.totalorder %s29, 1
      %p136 = por %p134, %p135
      %p138 = scmp.ne.s32.totalorder %s123, %s137
      %p139 = scmp.eq.s32.totalorder %s29, 0
      %p140 = por %p138, %p139
      %s142 = sadd.s32 %s141, 1
      %p145 = scmp.eq.s32.totalorder %s23, 1
      %p146 = scmp.ne.s32.totalorder %s141, %s143
      %p147 = scmp.eq.s32.totalorder %s23, 0
      %p148 = por %p146, %p147
      %p149 = scmp.ne.s32.totalorder %s141, %s143
      %p150 = scmp.eq.s32.totalorder %s28, 1
      %p151 = por %p149, %p150
      %p152 = scmp.ne.s32.totalorder %s143, %s144
      %p153 = scmp.eq.s32.totalorder %s28, 0
      %p154 = por %p152, %p153
      %p155 = scmp.ne.s32.totalorder %s143, %s144
      %p156 = scmp.eq.s32.totalorder %s29, 1
      %p157 = por %p155, %p156
      %p159 = scmp.ne.s32.totalorder %s144, %s158
      %p160 = scmp.eq.s32.totalorder %s29, 0
      %p161 = por %p159, %p160
      %s163 = sadd.s32 %s162, 1
      %p166 = scmp.eq.s32.totalorder %s23, 1
      %p167 = scmp.ne.s32.totalorder %s162, %s164
      %p168 = scmp.eq.s32.totalorder %s23, 0
      %p169 = por %p167, %p168
      %p170 = scmp.ne.s32.totalorder %s162, %s164
      %p171 = scmp.eq.s32.totalorder %s28, 1
      %p172 = por %p170, %p171
      %p173 = scmp.ne.s32.totalorder %s164, %s165
      %p174 = scmp.eq.s32.totalorder %s28, 0
      %p175 = por %p173, %p174
      %p176 = scmp.ne.s32.totalorder %s164, %s165
      %p177 = scmp.eq.s32.totalorder %s29, 1
      %p178 = por %p176, %p177
      %p180 = scmp.ne.s32.totalorder %s165, %s179
      %p181 = scmp.eq.s32.totalorder %s29, 0
      %p182 = por %p180, %p181
      %s184 = sadd.s32 %s183, 1
      %p187 = scmp.eq.s32.totalorder %s23, 1
      %p188 = scmp.ne.s32.totalorder %s183, %s185
      %p189 = scmp.eq.s32.totalorder %s23, 0
      %p190 = por %p188, %p189
      %p191 = scmp.ne.s32.totalorder %s183, %s185
      %p192 = scmp.eq.s32.totalorder %s28, 1
      %p193 = por %p191, %p192
      %p194 = scmp.ne.s32.totalorder %s185, %s186
      %p195 = scmp.eq.s32.totalorder %s28, 0
      %p196 = por %p194, %p195
      %p197 = scmp.ne.s32.totalorder %s185, %s186
      %p198 = scmp.eq.s32.totalorder %s29, 1
      %p199 = por %p197, %p198
      %p201 = scmp.ne.s32.totalorder %s186, %s200
      %p202 = scmp.eq.s32.totalorder %s29, 0
      %p203 = por %p201, %p202
      %s205 = sadd.s32 %s204, 1
      %p208 = scmp.eq.s32.totalorder %s23, 1
      %p209 = scmp.ne.s32.totalorder %s204, %s206
      %p210 = scmp.eq.s32.totalorder %s23, 0
      %p211 = por %p209, %p210
      %p212 = scmp.ne.s32.totalorder %s204, %s206
      %p213 = scmp.eq.s32.totalorder %s28, 1
      %p214 = por %p212, %p213
      %p215 = scmp.ne.s32.totalorder %s206, %s207
      %p216 = scmp.eq.s32.totalorder %s28, 0
      %p217 = por %p215, %p216
      %p218 = scmp.ne.s32.totalorder %s206, %s207
      %p219 = scmp.eq.s32.totalorder %s29, 1
      %p220 = por %p218, %p219
      %p222 = scmp.ne.s32.totalorder %s207, %s221
      %p223 = scmp.eq.s32.totalorder %s29, 0
      %p224 = por %p222, %p223
      %s225 = ssub.s32 %s23, %s30
      %p226 = scmp.eq.s32.totalorder %s225, 0
      %s228 = sadd.s32 %s227, 1
      %s229 = scalar_select %p226, %s227, %s228
      %p232 = pneg %p226
      %p233 = scmp.eq.s32.totalorder %s23, 1
      %p234 = por %p232, %p233
      %p235 = scmp.ne.s32.totalorder %s227, %s230
      %p236 = scmp.eq.s32.totalorder %s23, 0
      %p237 = por %p235, %p236
      %p238 = scmp.ne.s32.totalorder %s227, %s230
      %p239 = scmp.eq.s32.totalorder %s28, 1
      %p240 = por %p238, %p239
      %p241 = scmp.ne.s32.totalorder %s230, %s231
      %p242 = scmp.eq.s32.totalorder %s28, 0
      %p243 = por %p241, %p242
      %p244 = scmp.ne.s32.totalorder %s230, %s231
      %p245 = scmp.eq.s32.totalorder %s29, 1
      %p246 = por %p244, %p245
      %p248 = scmp.ne.s32.totalorder %s231, %s247
      %p249 = scmp.eq.s32.totalorder %s29, 0
      %p250 = por %p248, %p249
      %p251 = scmp.le.s32.totalorder 1, %s23
      %p252 = scmp.lt.s32.totalorder %s23, 3
      %p253 = pnand %p251, %p252
      %p254 = pneg %p253
      // Predicated region
      $region9: #{tpu_custom_call.1} parent=5 // pred_check
        _
      $region10: #{tpu_custom_call.1} parent=5 // pred_check_branch
        %256 = sbr.rel (%p253) target = $region12
      $region11: #{tpu_custom_call.1} parent=5 // pred_region
        %s257 = ssub.s32 %s23, 1
        // Predicated region
        $region13: #{tpu_custom_call.1} parent=11 // pred_check
          %p258 = pneg %p70
        $region14: #{tpu_custom_call.1} parent=11 // pred_check_branch
          %260 = sbr.rel (%p258) target = $region16
        $region15: #{tpu_custom_call.1} parent=11 // pred_region
          %262 = vsyncadd [#allocation6], 0
          %s263 = sshll.u32 %s1, 4
          %s264 = int_to_ptr.hbm [resolvable:$true] %s263
          %s265 = sshll.u32 [#allocation5], 4
          %s266 = int_to_ptr.vmem [resolvable:$true] %s265
          %271 = dma.hbm_to_vmem [thread:$0]  %s264, 256, %s266, [#allocation6], 128, 128, 8
        $region16: #{tpu_custom_call.1} parent=11 // pred_fallthru
          _
        // Predicated region
        $region17: #{tpu_custom_call.1} parent=11 // pred_check
          %p272 = pneg %p91
        $region18: #{tpu_custom_call.1} parent=11 // pred_check_branch
          %274 = sbr.rel (%p272) target = $region20
        $region19: #{tpu_custom_call.1} parent=11 // pred_region
          _
        $region20: #{tpu_custom_call.1} parent=11 // pred_fallthru
          _
        // Predicated region
        $region21: #{tpu_custom_call.1} parent=11 // pred_check
          %p275 = pneg %p112
        $region22: #{tpu_custom_call.1} parent=11 // pred_check_branch
          %277 = sbr.rel (%p275) target = $region24
        $region23: #{tpu_custom_call.1} parent=11 // pred_region
          %279 = vsyncadd [#allocation6], 0
          %s280 = sshll.u32 %s3, 4
          %s281 = int_to_ptr.hbm [resolvable:$true] %s280
          %s282 = sshll.u32 [#allocation7], 4
          %s283 = int_to_ptr.vmem [resolvable:$true] %s282
          %288 = dma.hbm_to_vmem [thread:$0]  %s281, 512, %s283, [#allocation6], 128, 128, 8
        $region24: #{tpu_custom_call.1} parent=11 // pred_fallthru
          _
        // Predicated region
        $region25: #{tpu_custom_call.1} parent=11 // pred_check
          %p289 = pneg %p133
        $region26: #{tpu_custom_call.1} parent=11 // pred_check_branch
          %291 = sbr.rel (%p289) target = $region28
        $region27: #{tpu_custom_call.1} parent=11 // pred_region
          _
        $region28: #{tpu_custom_call.1} parent=11 // pred_fallthru
          _
        // Predicated region
        $region29: #{tpu_custom_call.1} parent=11 // pred_check
          %p292 = pneg %p154
        $region30: #{tpu_custom_call.1} parent=11 // pred_check_branch
          %294 = sbr.rel (%p292) target = $region32
        $region31: #{tpu_custom_call.1} parent=11 // pred_region
          %296 = vsyncadd [#allocation9], 0
          %s297 = sshll.u32 %s5, 4
          %s298 = int_to_ptr.hbm [resolvable:$true] %s297
          %s299 = sshll.u32 [#allocation8], 4
          %s300 = int_to_ptr.vmem [resolvable:$true] %s299
          %305 = dma.hbm_to_vmem [thread:$0]  %s298, 512, %s300, [#allocation9], 128, 128, 8
        $region32: #{tpu_custom_call.1} parent=11 // pred_fallthru
          _
        // Predicated region
        $region33: #{tpu_custom_call.1} parent=11 // pred_check
          %p306 = pneg %p175
        $region34: #{tpu_custom_call.1} parent=11 // pred_check_branch
          %308 = sbr.rel (%p306) target = $region36
        $region35: #{tpu_custom_call.1} parent=11 // pred_region
          _
        $region36: #{tpu_custom_call.1} parent=11 // pred_fallthru
          _
        // Predicated region
        $region37: #{tpu_custom_call.1} parent=11 // pred_check
          %p309 = pneg %p196
        $region38: #{tpu_custom_call.1} parent=11 // pred_check_branch
          %311 = sbr.rel (%p309) target = $region40
        $region39: #{tpu_custom_call.1} parent=11 // pred_region
          _
        $region40: #{tpu_custom_call.1} parent=11 // pred_fallthru
          _
        // Predicated region
        $region41: #{tpu_custom_call.1} parent=11 // pred_check
          %p312 = pneg %p217
        $region42: #{tpu_custom_call.1} parent=11 // pred_check_branch
          %314 = sbr.rel (%p312) target = $region44
        $region43: #{tpu_custom_call.1} parent=11 // pred_region
          _
        $region44: #{tpu_custom_call.1} parent=11 // pred_fallthru
          _
      $region12: #{tpu_custom_call.1} parent=5 // pred_fallthru
        _
      %p315 = scmp.lt.s32.totalorder %s23, 2
      // Predicated region
      $region45: #{tpu_custom_call.1} parent=5 // pred_check
        %p316 = pneg %p315
      $region46: #{tpu_custom_call.1} parent=5 // pred_check_branch
        %318 = sbr.rel (%p316) target = $region48
      $region47: #{tpu_custom_call.1} parent=5 // pred_region
        // Predicated region
        $region49: #{tpu_custom_call.1} parent=47 // pred_check
          %p319 = pneg %p43
        $region50: #{tpu_custom_call.1} parent=47 // pred_check_branch
          %321 = sbr.rel (%p319) target = $region52
        $region51: #{tpu_custom_call.1} parent=47 // pred_region
          %s322 = sand.u32 %s33, 1
          %s323 = scalar_lea.sflag [#allocation3], %s322
          %s324 = sand.u32 %s33, 1
          %s325 = smul.addr %s324, 8
          %s326 = scalar_lea.vmem [#allocation2], %s325
          %328 = vsyncadd %s323, 0
          %s329 = smul.addr %s23, 8
          %s330 = scalar_lea.hbm %s0, %s329
          %s332 = sshll.u32 %s330, 4
          %s333 = int_to_ptr.hbm [resolvable:$true] %s332
          %s334 = sshll.u32 %s326, 4
          %s335 = int_to_ptr.vmem [resolvable:$true] %s334
          %337 = dma.hbm_to_vmem [thread:$0]  %s333, 128, %s335, %s323
        $region52: #{tpu_custom_call.1} parent=47 // pred_fallthru
          _
      $region48: #{tpu_custom_call.1} parent=5 // pred_fallthru
        _
      %p338 = scmp.le.s32.totalorder 1, %s23
      %p339 = scmp.lt.s32.totalorder %s23, 3
      %p340 = pnand %p338, %p339
      %p341 = pneg %p340
      // Predicated region
      $region53: #{tpu_custom_call.1} parent=5 // pred_check
        _
      $region54: #{tpu_custom_call.1} parent=5 // pred_check_branch
        %343 = sbr.rel (%p340) target = $region56
      $region55: #{tpu_custom_call.1} parent=5 // pred_region
        %s344 = ssub.s32 %s23, 1
        %s345 = sand.u32 %s36, 1
        %s346 = scalar_lea.sflag [#allocation3], %s345
        %s347 = sand.u32 %s36, 1
        %s348 = smul.addr %s347, 8
        %s349 = scalar_lea.vmem [#allocation2], %s348
        // Predicated region
        $region57: #{tpu_custom_call.1} parent=55 // pred_check
          %p350 = pneg %p49
        $region58: #{tpu_custom_call.1} parent=55 // pred_check_branch
          %352 = sbr.rel (%p350) target = $region60
        $region59: #{tpu_custom_call.1} parent=55 // pred_region
          %354 = dma.done %s346, 128
        $region60: #{tpu_custom_call.1} parent=55 // pred_fallthru
          _
        // Predicated region
        $region61: #{tpu_custom_call.1} parent=55 // pred_check
          %p355 = pneg %p70
        $region62: #{tpu_custom_call.1} parent=55 // pred_check_branch
          %357 = sbr.rel (%p355) target = $region64
        $region63: #{tpu_custom_call.1} parent=55 // pred_region
          %359 = dma.done [#allocation6], 256
        $region64: #{tpu_custom_call.1} parent=55 // pred_fallthru
          _
        // Predicated region
        $region65: #{tpu_custom_call.1} parent=55 // pred_check
          %p360 = pneg %p112
        $region66: #{tpu_custom_call.1} parent=55 // pred_check_branch
          %362 = sbr.rel (%p360) target = $region68
        $region67: #{tpu_custom_call.1} parent=55 // pred_region
          %364 = dma.done [#allocation6], 512
        $region68: #{tpu_custom_call.1} parent=55 // pred_fallthru
          _
        // Predicated region
        $region69: #{tpu_custom_call.1} parent=55 // pred_check
          %p365 = pneg %p154
        $region70: #{tpu_custom_call.1} parent=55 // pred_check_branch
          %367 = sbr.rel (%p365) target = $region72
        $region71: #{tpu_custom_call.1} parent=55 // pred_region
          %369 = dma.done [#allocation9], 512
        $region72: #{tpu_custom_call.1} parent=55 // pred_fallthru
          _
        %s370 = sand.u32 %s36, 1
        %s371 = scalar_lea.sflag [#allocation3], %s370
        %s372 = sand.u32 %s36, 1
        %s373 = smul.addr %s372, 8
        %s374 = scalar_lea.vmem [#allocation2], %s373
        %p375 = pneg %p49
        %p376 = pneg %p46
        %p377 = pneg %p70
        %p378 = pneg %p67
        %p379 = pneg %p91
        %p380 = pneg %p88
        %p381 = pneg %p112
        %p382 = pneg %p109
        %p383 = pneg %p133
        %p384 = pneg %p130
        %p385 = pneg %p154
        %p386 = pneg %p151
        %p387 = pneg %p175
        %p388 = pneg %p172
        %p389 = pneg %p196
        %p390 = pneg %p193
        %p391 = pneg %p217
        %p392 = pneg %p214
        %p393 = pneg %p243
        %p394 = pneg %p240
        %s395 = sand.u32 %s230, 1
        %s396 = scalar_lea.sflag [#allocation4], %s395
        %s397 = sand.u32 %s230, 1
        %s398 = smul.addr %s397, 8
        %s399 = scalar_lea.vmem [#allocation10], %s398
        %v400 = vld [vmem:[%s349] sm:$0xff]
        %v401 = vld [vmem:[#allocation5] sm:$0xff]
        %v402 = vld [vmem:[#allocation5 + $0x8] sm:$0xff]
        %v403 = vld [vmem:[%s2] sm:$0x1]
        %v405 = vperm.slane %v403, 0
        %vm407 = vcmask 130048
        %v409 = vsel %vm407, %v400, 0
        %411 = vmatpush.msra.mxu0 0.0
        %412 = vmatpush.msra.mxu0 0.0
        %413 = vmatpush.msra.mxu0 0.0
        %414 = vmatpush.msra.mxu0 0.0
        %415 = vmatpush.msra.mxu0 0.0
        %416 = vmatpush.msra.mxu0 0.0
        %417 = vmatpush.msra.mxu0 0.0
        %418 = vmatpush.msra.mxu0 0.0
        %419 = vmatpush.msra.mxu0 0.0
        %420 = vmatpush.msra.mxu0 0.0
        %421 = vmatpush.msra.mxu0 0.0
        %422 = vmatpush.msra.mxu0 0.0
        %423 = vmatpush.msra.mxu0 0.0
        %424 = vmatpush.msra.mxu0 0.0
        %425 = vmatpush.msra.mxu0 %v402
        %426 = vmatpush.msra.mxu0 %v401
        %427 = vmatmul.f32.gmra.mxu0 %v409
        %v428 = vpop.f32.mrf.mxu0
        %v429 = vadd.f32 %v405, %v428
        %430 = vdwg.mxu0
        %vm431 = vcmp.gt.f32.partialorder %v429, 0.0
        %v432 = vmin.f32 %v429, 0.0
        %v433 = vmul.f32 %v432, 1.442695
        %v434 = vpow.pop %v433
        %v435 = vsub.f32 %v434, 1.0
        %v436 = vsel %vm431, %v429, %v435
        %v437 = vld [vmem:[#allocation7] sm:$0xff]
        %v438 = vld [vmem:[#allocation7 + $0x8] sm:$0xff]
        %v439 = vld [vmem:[#allocation7 + $0x10] sm:$0xff]
        %v440 = vld [vmem:[#allocation7 + $0x18] sm:$0xff]
        %v441 = vld [vmem:[%s4] sm:$0x1]
        %v443 = vperm.slane %v441, 0
        %vm445 = vcmask 261120
        %v447 = vsel %vm445, %v436, 0
        %449 = vmatpush.msra.mxu0 0.0
        %450 = vmatpush.msra.mxu0 0.0
        %451 = vmatpush.msra.mxu0 0.0
        %452 = vmatpush.msra.mxu0 0.0
        %453 = vmatpush.msra.mxu0 0.0
        %454 = vmatpush.msra.mxu0 0.0
        %455 = vmatpush.msra.mxu0 0.0
        %456 = vmatpush.msra.mxu0 0.0
        %457 = vmatpush.msra.mxu0 0.0
        %458 = vmatpush.msra.mxu0 0.0
        %459 = vmatpush.msra.mxu0 0.0
        %460 = vmatpush.msra.mxu0 0.0
        %461 = vmatpush.msra.mxu0 %v440
        %462 = vmatpush.msra.mxu0 %v439
        %463 = vmatpush.msra.mxu0 %v438
        %464 = vmatpush.msra.mxu0 %v437
        %465 = vmatmul.f32.gmra.mxu0 %v447
        %v466 = vpop.f32.mrf.mxu0
        %v467 = vadd.f32 %v443, %v466
        %468 = vdwg.mxu0
        %vm469 = vcmp.gt.f32.partialorder %v467, 0.0
        %v470 = vmin.f32 %v467, 0.0
        %v471 = vmul.f32 %v470, 1.442695
        %v472 = vpow.pop %v471
        %v473 = vsub.f32 %v472, 1.0
        %v474 = vsel %vm469, %v467, %v473
        %v475 = vld [vmem:[#allocation8] sm:$0xff]
        %v476 = vld [vmem:[#allocation8 + $0x8] sm:$0xff]
        %v477 = vld [vmem:[#allocation8 + $0x10] sm:$0xff]
        %v478 = vld [vmem:[#allocation8 + $0x18] sm:$0xff]
        %v479 = vld [vmem:[%s6] sm:$0x1]
        %v481 = vperm.slane %v479, 0
        %v484 = vsel %vm445, %v474, 0
        %486 = vmatpush.msra.mxu0 0.0
        %487 = vmatpush.msra.mxu0 0.0
        %488 = vmatpush.msra.mxu0 0.0
        %489 = vmatpush.msra.mxu0 0.0
        %490 = vmatpush.msra.mxu0 0.0
        %491 = vmatpush.msra.mxu0 0.0
        %492 = vmatpush.msra.mxu0 0.0
        %493 = vmatpush.msra.mxu0 0.0
        %494 = vmatpush.msra.mxu0 0.0
        %495 = vmatpush.msra.mxu0 0.0
        %496 = vmatpush.msra.mxu0 0.0
        %497 = vmatpush.msra.mxu0 0.0
        %498 = vmatpush.msra.mxu0 %v478
        %499 = vmatpush.msra.mxu0 %v477
        %500 = vmatpush.msra.mxu0 %v476
        %501 = vmatpush.msra.mxu0 %v475
        %502 = vmatmul.f32.gmra.mxu0 %v484
        %v503 = vpop.f32.mrf.mxu0
        %v504 = vadd.f32 %v481, %v503
        %505 = vdwg.mxu0
        %v506 = vxor.u32 %v504, 2147483648
        %v507 = vmul.f32 %v506, 1.442695
        %v508 = vpow.pop %v507
        %v509 = vadd.f32 %v508, 1.0
        %v510 = vrcp.pop %v509
        %v511 = vmul.f32 %v509, %v510
        %v512 = vsub.f32 1.0, %v511
        %v513 = vmul.f32 %v510, %v512
        %v514 = vadd.f32 %v510, %v513
        %vm515 = vweird.f32 %v509
        %vm516 = vweird.f32 %v510
        %vm517 = vmor %vm515, %vm516
        %v518 = vsel %vm517, %v510, %v514
        %v519 = vand.u32 2147483647, %v509
        %vm520 = vcmp.eq.f32.partialorder %v519, 8.507059e+37
        %v521 = vand.u32 %v509, 2147483648
        %v522 = vor.u32 1.1754944e-38, %v521
        %v523 = vsel %vm520, %v522, %v518
        %v524 = vmul.f32 1.0, %v523
        %526 = vrot.lane.b32.xlu0 %v504, 96
        %v527 = vpop.permute.xlu0 %526
        %v529 = vmul.f32 %v524, %v527
        %531 = vrot.lane.b32.xlu0 %v429, 96
        %v532 = vpop.permute.xlu0 %531
        %v534 = vadd.f32 %v529, %v532
        %v535 = vsel %vm445, %v534, 0.0
        %536 = vadd.xlane.f32.xlu0 %v535
        %v537 = vpop.xlane.xlu0 %536
        %v538 = vrcp.pop 32.0
        %v539 = vmul.f32 32.0, %v538
        %v540 = vsub.f32 1.0, %v539
        %v541 = vmul.f32 %v538, %v540
        %v542 = vadd.f32 %v538, %v541
        %vm543 = vweird.f32 %v538
        %v544 = vsel %vm543, %v538, %v542
        %v545 = vmul.f32 %v537, %v544
        %v546 = vsub.f32 %v534, %v545
        %v547 = vmul.f32 %v546, %v546
        %v548 = vsel %vm445, %v547, 0.0
        %549 = vadd.xlane.f32.xlu0 %v548
        %v550 = vpop.xlane.xlu0 %549
        %v551 = vmul.f32 %v550, %v544
        %v552 = vadd.f32 %v551, 1e-05
        %v553 = vrsqrt.pop %v552
        %v554 = vmul.f32 %v553, %v552
        %v555 = vmul.f32 %v554, %v553
        %v556 = vmul.f32 0.5, %v555
        %v557 = vsub.f32 1.5, %v556
        %v558 = vmul.f32 %v553, %v557
        %vm559 = vweird.f32 %v552
        %vm560 = vweird.f32 %v553
        %vm561 = vmor %vm559, %vm560
        %v562 = vsel %vm561, %v553, %v558
        %v563 = vmul.f32 %v546, %v562
        %v564 = vld [vmem:[%s7] sm:$0x1]
        %v566 = vperm.slane %v564, 0
        %v568 = vmul.f32 %v563, %v566
        %v569 = vld [vmem:[%s8] sm:$0x1]
        %v571 = vperm.slane %v569, 0
        %v573 = vadd.f32 %v568, %v571
        %574 = vst.msk [vmem:[%s399] sm:$0xff] %vm445, %v573
        %s575 = sand.u32 %s230, 1
        %s576 = scalar_lea.sflag [#allocation4], %s575
        %s577 = sand.u32 %s230, 1
        %s578 = smul.addr %s577, 8
        %s579 = scalar_lea.vmem [#allocation10], %s578
        // Predicated region
        $region73: #{tpu_custom_call.1} parent=55 // pred_check
          %p580 = pneg %p240
        $region74: #{tpu_custom_call.1} parent=55 // pred_check_branch
          %582 = sbr.rel (%p580) target = $region76
        $region75: #{tpu_custom_call.1} parent=55 // pred_region
          %584 = vsyncadd %s576, 0
          %s585 = smul.addr %s28, 8
          %s586 = scalar_lea.hbm %s9, %s585
          %s588 = sshll.u32 %s579, 4
          %s589 = int_to_ptr.vmem [resolvable:$true] %s588
          %s590 = sshll.u32 %s586, 4
          %s591 = int_to_ptr.hbm [resolvable:$true] %s590
          %593 = dma.vmem_to_hbm [thread:$0]  %s589, 128, %s591, %s576
        $region76: #{tpu_custom_call.1} parent=55 // pred_fallthru
          _
      $region56: #{tpu_custom_call.1} parent=5 // pred_fallthru
        _
      %p594 = scmp.le.s32.totalorder 2, %s23
      // Predicated region
      $region77: #{tpu_custom_call.1} parent=5 // pred_check
        %p595 = pneg %p594
      $region78: #{tpu_custom_call.1} parent=5 // pred_check_branch
        %597 = sbr.rel (%p595) target = $region80
      $region79: #{tpu_custom_call.1} parent=5 // pred_region
        %s598 = ssub.s32 %s23, 2
        // Predicated region
        $region81: #{tpu_custom_call.1} parent=79 // pred_check
          %p599 = pneg %p246
        $region82: #{tpu_custom_call.1} parent=79 // pred_check_branch
          %601 = sbr.rel (%p599) target = $region84
        $region83: #{tpu_custom_call.1} parent=79 // pred_region
          %s602 = sand.u32 %s231, 1
          %s603 = scalar_lea.sflag [#allocation4], %s602
          %s604 = sand.u32 %s231, 1
          %s605 = smul.addr %s604, 8
          %s606 = scalar_lea.vmem [#allocation10], %s605
          %608 = dma.done %s603, 128
        $region84: #{tpu_custom_call.1} parent=79 // pred_fallthru
          _
      $region80: #{tpu_custom_call.1} parent=5 // pred_fallthru
        _
    $region6: #{tpu_custom_call.1} parent=1 // loop_footer
      %s27 = sadd.s32 1, %s23
    $region7: #{tpu_custom_call.1} parent=1 // loop_footer_branch
      %22 = sbr.rel target = $region3
    $region8: #{tpu_custom_call.1} parent=1 // loop_exit
      _
    %609 = vsyncpa [#allocation3], 1
    %s610 = scalar_lea.sflag [#allocation3], 1
    %611 = vsyncpa %s610, 1
    %612 = vsyncpa [#allocation6], 1
    %613 = vsyncpa [#allocation9], 1
    %614 = vsyncpa [#allocation4], 1
    %s615 = scalar_lea.sflag [#allocation4], 1
    %616 = vsyncpa %s615, 1

</llo_original>
